<compile_context>
chip_gen: v7x
topology: tpu7x:2x2x1
jax: 0.10.0
libtpu: 0.0.40
codegen_flags: <defaults>
</compile_context>

<pallas_src>
import math

import jax
import jax.numpy as jnp
from jax.experimental import pallas as pl
from jax.experimental.pallas import tpu as pltpu

_LANE = 128
_SUBLANE = 8


def _round_up(n, m):
    return ((n + m - 1) // m) * m


def _cdiv(a, b):
    return -(-a // b)


def _gelu(x):
    # tanh-approximation GELU (EUP tanh slot, effectively free).
    # TODO(synk): torch.nn.GELU() defaults to the exact erf form; erf has no clean
    #             Mosaic lowering, so the tanh approximation (~1e-3 difference) is used.
    c = 0.7978845608028654  # sqrt(2/pi)
    return 0.5 * x * (1.0 + jnp.tanh(c * (x + 0.044715 * x * x * x)))


# ----------------------------------------------------------------------------- kernel
def _fused_model_kernel(x_ref, w_first_ref, enc_w_ref, dec_w_ref, reg_w_ref,
                        w_last_ref, enc_b_ref, dec_b_ref, reg_b_ref, b_last_ref,
                        out_ref):
    """Fused AutoEncoder + Regressor forward for one row-tile.

    All hidden weights live in stacked (n, 128, 128) bf16 slabs; the latent
    `features` never leaves VMEM/vregs.
    """
    dec_out_p = w_last_ref.shape[1]
    n_enc = enc_b_ref.shape[0]           # encoder layer count
    n_dec_hidden = dec_b_ref.shape[0]    # decoder hidden-layer count (final handled separately)
    n_reg = reg_b_ref.shape[0]           # regressor layer count

    def layer(h, w, b, activate):
        # bf16 MXU inputs, f32 accumulation; elementwise math stays in f32.
        y = jnp.dot(h.astype(w.dtype), w, preferred_element_type=jnp.float32)
        y = y + b.astype(jnp.float32)
        return _gelu(y) if activate else y

    # ---------------- encoder ----------------
    h = layer(x_ref[...], w_first_ref[...], enc_b_ref[0], activate=(n_enc > 1))
    for l in range(1, n_enc):
        h = layer(h, enc_w_ref[l - 1], enc_b_ref[l], activate=(l < n_enc - 1))
    features = h                                  # f32 (tb, hid_p), stays on-chip

    # ---------------- decoder ----------------
    h = features
    for l in range(n_dec_hidden):
        h = layer(h, dec_w_ref[l], dec_b_ref[l], activate=True)
    dec_out = layer(h, w_last_ref[...], b_last_ref[...], activate=False)

    # ---------------- regressor --------------
    h = features
    for l in range(n_reg):
        h = layer(h, reg_w_ref[l], reg_b_ref[l], activate=(l < n_reg - 1))
    mass = h                                      # f32 (tb, hid_p), useful lane 0

    # Single lane-dense output slab: [ dec_out | mass ]
    out_ref[:, :dec_out_p] = dec_out.astype(out_ref.dtype)
    out_ref[:, dec_out_p:] = mass.astype(out_ref.dtype)


# ------------------------------------------------------------------------ param init
def _linear_init(key, din, dout):
    kw, kb = jax.random.split(key)
    bound = 1.0 / math.sqrt(din)
    w = jax.random.uniform(kw, (din, dout), jnp.float32, -bound, bound)
    b = jax.random.uniform(kb, (dout,), jnp.float32, -bound, bound)
    return w, b


def _pad_w(w, rows, cols):
    return jnp.zeros((rows, cols), jnp.float32).at[:w.shape[0], :w.shape[1]].set(w)


def _pad_b(b, cols):
    return jnp.zeros((1, cols), jnp.float32).at[0, :b.shape[0]].set(b)


def init_model_params(key, input_dim, features_dim,
                      encoder_inner_layers=(128, 64, 32),
                      reg_inner_layers=(128, 64, 32)):
    """Packed, zero-padded, bf16-weight parameters for the fused kernel."""
    enc_dims = [input_dim, *encoder_inner_layers, features_dim]
    dec_dims = [features_dim, *reversed(encoder_inner_layers), input_dim]
    reg_dims = [features_dim, *reg_inner_layers, 1]

    hidden_dims = [*encoder_inner_layers, features_dim, *reg_inner_layers, 1]
    hid_p = max(_round_up(d, _LANE) for d in hidden_dims)   # 128 with defaults
    in_p = _round_up(input_dim, _LANE)

    def make_raw(key, dims):
        keys = jax.random.split(key, len(dims) - 1)
        return [_linear_init(k, din, dout)
                for k, din, dout in zip(keys, dims[:-1], dims[1:])]

    k_enc, k_dec, k_reg = jax.random.split(key, 3)
    enc_raw = make_raw(k_enc, enc_dims)
    dec_raw = make_raw(k_dec, dec_dims)
    reg_raw = make_raw(k_reg, reg_dims)

    bf16 = jnp.bfloat16
    params = dict(
        # encoder: first layer (in_p, hid_p) + stacked hidden weights
        w_first=_pad_w(enc_raw[0][0], in_p, hid_p).astype(bf16),
        enc_w=jnp.stack([_pad_w(w, hid_p, hid_p) for w, _ in enc_raw[1:]]).astype(bf16),
        enc_b=jnp.stack([_pad_b(b, hid_p) for _, b in enc_raw]),            # (n_enc,1,hid_p) f32
        # decoder: stacked hidden weights + final layer (hid_p, in_p)
        dec_w=jnp.stack([_pad_w(w, hid_p, hid_p) for w, _ in dec_raw[:-1]]).astype(bf16),
        dec_b=jnp.stack([_pad_b(b, hid_p) for _, b in dec_raw[:-1]]),        # (n_dec-1,1,hid_p)
        w_last=_pad_w(dec_raw[-1][0], hid_p, in_p).astype(bf16),
        b_last=_pad_b(dec_raw[-1][1], in_p),                                 # (1, in_p) f32
        # regressor: stacked weights (final 1-wide output padded to hid_p lanes)
        reg_w=jnp.stack([_pad_w(w, hid_p, hid_p) for w, _ in reg_raw]).astype(bf16),
        reg_b=jnp.stack([_pad_b(b, hid_p) for _, b in reg_raw]),             # (n_reg,1,hid_p)
    )
    return params


# --------------------------------------------------------------------------- wrapper
def model_forward(x, params, *, max_block_rows=512):
    """Equivalent of Model.forward(espectro) -> (dec_out, mass), one fused kernel."""
    batch, input_dim = x.shape                    # static Python ints
    in_p = params["w_first"].shape[0]             # padded input width
    dec_out_p = params["w_last"].shape[1]         # padded decoder output width
    hid_p = params["reg_w"].shape[2]              # padded hidden / mass width
    out_w = dec_out_p + hid_p                     # merged output slab width

    # Row tiling: cover batch with <=7 padded rows per block; split big batches,
    # and split batches >=16 into >=2 blocks so the parallel axis can use both TCs.
    num_blocks = max(1, _cdiv(batch, max_block_rows))
    if num_blocks == 1 and batch >= 2 * _SUBLANE:
        num_blocks = 2
    tb = _round_up(_cdiv(batch, num_blocks), _SUBLANE)
    num_blocks = _cdiv(batch, tb)
    b_pad = num_blocks * tb

    # bf16 input DMA (first matmul consumes bf16 anyway); pad rows/lanes with zeros.
    x_bf = x.astype(jnp.bfloat16)
    if (b_pad, in_p) != x.shape:
        x_bf = jnp.zeros((b_pad, in_p), jnp.bfloat16).at[:batch, :input_dim].set(x_bf)

    param_order = ("w_first", "enc_w", "dec_w", "reg_w", "w_last",
                   "enc_b", "dec_b", "reg_b", "b_last")
    param_args = [params[k] for k in param_order]

    def _const_map(ndim):
        zeros = (0,) * ndim
        return lambda i: zeros

    in_specs = [pl.BlockSpec((tb, in_p), lambda i: (i, 0))]
    for p in param_args:
        in_specs.append(pl.BlockSpec(p.shape, _const_map(p.ndim)))   # resident across grid

    out_spec = pl.BlockSpec((tb, out_w), lambda i: (i, 0))
    out_shape = jax.ShapeDtypeStruct((b_pad, out_w), jnp.float32)

    out = pl.pallas_call(
        _fused_model_kernel,
        grid=(num_blocks,),
        in_specs=in_specs,
        out_specs=out_spec,
        out_shape=out_shape,
        compiler_params=pltpu.CompilerParams(
            dimension_semantics=("parallel",)),
    )(x_bf, *param_args)

    dec_out = out[:batch, :input_dim]
    mass = out[:batch, dec_out_p:dec_out_p + 1]
    return dec_out, mass


# ---------------------------------------------------------------- pure-JAX reference
def reference_forward(x, params):
    f32 = jnp.float32

    def layer(h, w, b, act):
        y = jnp.dot(h, w.astype(f32), preferred_element_type=f32) + b.astype(f32)
        return _gelu(y) if act else y

    batch, input_dim = x.shape
    in_p = params["w_first"].shape[0]
    xp = jnp.zeros((batch, in_p), f32).at[:, :input_dim].set(x.astype(f32))

    n_enc = params["enc_b"].shape[0]
    h = layer(xp, params["w_first"], params["enc_b"][0], n_enc > 1)
    for l in range(1, n_enc):
        h = layer(h, params["enc_w"][l - 1], params["enc_b"][l], l < n_enc - 1)
    feat = h

    h = feat
    for l in range(params["dec_b"].shape[0]):
        h = layer(h, params["dec_w"][l], params["dec_b"][l], True)
    dec = layer(h, params["w_last"], params["b_last"], False)

    h = feat
    n_reg = params["reg_b"].shape[0]
    for l in range(n_reg):
        h = layer(h, params["reg_w"][l], params["reg_b"][l], l < n_reg - 1)

    return dec[:, :input_dim], h[:, :1]


if __name__ == "__main__":
    input_dim = 256     # spectrum length
    features_dim = 16   # latent features
    batch = 8

    key = jax.random.PRNGKey(0)
    k_params, k_x = jax.random.split(key)

    params = init_model_params(k_params, input_dim, features_dim)
    x = jax.random.normal(k_x, (batch, input_dim), jnp.float32)

    fwd = jax.jit(model_forward)
    dec_out, mass = fwd(x, params)
    jax.block_until_ready((dec_out, mass))

    assert dec_out.shape == (batch, input_dim), dec_out.shape
    assert mass.shape == (batch, 1), mass.shape
    assert bool(jnp.all(jnp.isfinite(dec_out))) and bool(jnp.all(jnp.isfinite(mass)))

    # Sanity check against a pure-JAX reference (bf16-weight/input quantization tolerance).
    dec_ref, mass_ref = reference_forward(x, params)
    assert float(jnp.max(jnp.abs(dec_out - dec_ref))) < 1e-1
    assert float(jnp.max(jnp.abs(mass - mass_ref))) < 1e-1

    print("KERNEL_OK")
</pallas_src>

<mosaic_0001>
module attributes {stable_mosaic.version = 11 : i64} {
  func.func @_fused_model_kernel(%arg0: i32, %arg1: memref<8x256xbf16, #tpu.memory_space<vmem>>, %arg2: memref<256x128xbf16, #tpu.memory_space<vmem>>, %arg3: memref<3x128x128xbf16, #tpu.memory_space<vmem>>, %arg4: memref<3x128x128xbf16, #tpu.memory_space<vmem>>, %arg5: memref<4x128x128xbf16, #tpu.memory_space<vmem>>, %arg6: memref<128x256xbf16, #tpu.memory_space<vmem>>, %arg7: memref<4x1x128xf32, #tpu.memory_space<vmem>>, %arg8: memref<3x1x128xf32, #tpu.memory_space<vmem>>, %arg9: memref<4x1x128xf32, #tpu.memory_space<vmem>>, %arg10: memref<1x256xf32, #tpu.memory_space<vmem>>, %arg11: memref<8x384xf32, #tpu.memory_space<vmem>>) attributes {dimension_semantics = [#tpu.dimension_semantics<parallel>], iteration_bounds = array<i64: 1>, scalar_prefetch = 0 : i64, scratch_operands = 0 : i64, tpu.core_type = #tpu.core_type<tc>, window_params = [{transform_indices = @transform_0, window_bounds = array<i64: 8, 256>}, {pipeline_mode = #tpu.pipeline_mode<synchronous>, transform_indices = @transform_1, window_bounds = array<i64: 256, 128>}, {pipeline_mode = #tpu.pipeline_mode<synchronous>, transform_indices = @transform_2, window_bounds = array<i64: 3, 128, 128>}, {pipeline_mode = #tpu.pipeline_mode<synchronous>, transform_indices = @transform_3, window_bounds = array<i64: 3, 128, 128>}, {pipeline_mode = #tpu.pipeline_mode<synchronous>, transform_indices = @transform_4, window_bounds = array<i64: 4, 128, 128>}, {pipeline_mode = #tpu.pipeline_mode<synchronous>, transform_indices = @transform_5, window_bounds = array<i64: 128, 256>}, {pipeline_mode = #tpu.pipeline_mode<synchronous>, transform_indices = @transform_6, window_bounds = array<i64: 4, 1, 128>}, {pipeline_mode = #tpu.pipeline_mode<synchronous>, transform_indices = @transform_7, window_bounds = array<i64: 3, 1, 128>}, {pipeline_mode = #tpu.pipeline_mode<synchronous>, transform_indices = @transform_8, window_bounds = array<i64: 4, 1, 128>}, {pipeline_mode = #tpu.pipeline_mode<synchronous>, transform_indices = @transform_9, window_bounds = array<i64: 1, 256>}, {transform_indices = @transform_10, window_bounds = array<i64: 8, 384>}]} {
    %c0 = arith.constant 0 : index
    %c0_0 = arith.constant 0 : index
    %0 = vector.load %arg1[%c0, %c0_0] : memref<8x256xbf16, #tpu.memory_space<vmem>>, vector<8x256xbf16>
    %c0_1 = arith.constant 0 : index
    %c0_2 = arith.constant 0 : index
    %1 = vector.load %arg2[%c0_1, %c0_2] : memref<256x128xbf16, #tpu.memory_space<vmem>>, vector<256x128xbf16>
    %c0_3 = arith.constant 0 : index
    %c0_4 = arith.constant 0 : index
    %c0_5 = arith.constant 0 : index
    %2 = vector.load %arg7[%c0_3, %c0_4, %c0_5] : memref<4x1x128xf32, #tpu.memory_space<vmem>>, vector<1x1x128xf32>
    %3 = vector.shape_cast %2 : vector<1x1x128xf32> to vector<1x128xf32>
    %cst = arith.constant dense<0.000000e+00> : vector<8x128xf32>
    %4 = tpu.matmul %0, %1, %cst {dimension_numbers = #tpu.dot_dimension_numbers<[1], [0], [0], [1], [0, 0, 1, 1], [], []>} : vector<8x256xbf16>, vector<256x128xbf16>, vector<8x128xf32> -> vector<8x128xf32>
    %5 = vector.broadcast %3 : vector<1x128xf32> to vector<8x128xf32>
    %6 = arith.addf %4, %5 : vector<8x128xf32>
    %cst_6 = arith.constant 5.000000e-01 : f32
    %7 = vector.broadcast %cst_6 : f32 to vector<8x128xf32>
    %8 = arith.mulf %7, %6 : vector<8x128xf32>
    %cst_7 = arith.constant 4.471500e-02 : f32
    %9 = vector.broadcast %cst_7 : f32 to vector<8x128xf32>
    %10 = arith.mulf %9, %6 : vector<8x128xf32>
    %11 = arith.mulf %10, %6 : vector<8x128xf32>
    %12 = arith.mulf %11, %6 : vector<8x128xf32>
    %13 = arith.addf %6, %12 : vector<8x128xf32>
    %cst_8 = arith.constant 0.797884583 : f32
    %14 = vector.broadcast %cst_8 : f32 to vector<8x128xf32>
    %15 = arith.mulf %14, %13 : vector<8x128xf32>
    %16 = math.tanh %15 : vector<8x128xf32>
    %cst_9 = arith.constant 1.000000e+00 : f32
    %17 = vector.broadcast %cst_9 : f32 to vector<8x128xf32>
    %18 = arith.addf %17, %16 : vector<8x128xf32>
    %19 = arith.mulf %8, %18 : vector<8x128xf32>
    %c0_10 = arith.constant 0 : index
    %c0_11 = arith.constant 0 : index
    %c0_12 = arith.constant 0 : index
    %20 = vector.load %arg3[%c0_10, %c0_11, %c0_12] : memref<3x128x128xbf16, #tpu.memory_space<vmem>>, vector<1x128x128xbf16>
    %21 = vector.shape_cast %20 : vector<1x128x128xbf16> to vector<128x128xbf16>
    %c1 = arith.constant 1 : index
    %c0_13 = arith.constant 0 : index
    %c0_14 = arith.constant 0 : index
    %22 = vector.load %arg7[%c1, %c0_13, %c0_14] : memref<4x1x128xf32, #tpu.memory_space<vmem>>, vector<1x1x128xf32>
    %23 = vector.shape_cast %22 : vector<1x1x128xf32> to vector<1x128xf32>
    %24 = arith.truncf %19 : vector<8x128xf32> to vector<8x128xbf16>
    %cst_15 = arith.constant dense<0.000000e+00> : vector<8x128xf32>
    %25 = tpu.matmul %24, %21, %cst_15 {dimension_numbers = #tpu.dot_dimension_numbers<[1], [0], [0], [1], [0, 0, 1, 1], [], []>} : vector<8x128xbf16>, vector<128x128xbf16>, vector<8x128xf32> -> vector<8x128xf32>
    %26 = vector.broadcast %23 : vector<1x128xf32> to vector<8x128xf32>
    %27 = arith.addf %25, %26 : vector<8x128xf32>
    %cst_16 = arith.constant 5.000000e-01 : f32
    %28 = vector.broadcast %cst_16 : f32 to vector<8x128xf32>
    %29 = arith.mulf %28, %27 : vector<8x128xf32>
    %cst_17 = arith.constant 4.471500e-02 : f32
    %30 = vector.broadcast %cst_17 : f32 to vector<8x128xf32>
    %31 = arith.mulf %30, %27 : vector<8x128xf32>
    %32 = arith.mulf %31, %27 : vector<8x128xf32>
    %33 = arith.mulf %32, %27 : vector<8x128xf32>
    %34 = arith.addf %27, %33 : vector<8x128xf32>
    %cst_18 = arith.constant 0.797884583 : f32
    %35 = vector.broadcast %cst_18 : f32 to vector<8x128xf32>
    %36 = arith.mulf %35, %34 : vector<8x128xf32>
    %37 = math.tanh %36 : vector<8x128xf32>
    %cst_19 = arith.constant 1.000000e+00 : f32
    %38 = vector.broadcast %cst_19 : f32 to vector<8x128xf32>
    %39 = arith.addf %38, %37 : vector<8x128xf32>
    %40 = arith.mulf %29, %39 : vector<8x128xf32>
    %c1_20 = arith.constant 1 : index
    %c0_21 = arith.constant 0 : index
    %c0_22 = arith.constant 0 : index
    %41 = vector.load %arg3[%c1_20, %c0_21, %c0_22] : memref<3x128x128xbf16, #tpu.memory_space<vmem>>, vector<1x128x128xbf16>
    %42 = vector.shape_cast %41 : vector<1x128x128xbf16> to vector<128x128xbf16>
    %c2 = arith.constant 2 : index
    %c0_23 = arith.constant 0 : index
    %c0_24 = arith.constant 0 : index
    %43 = vector.load %arg7[%c2, %c0_23, %c0_24] : memref<4x1x128xf32, #tpu.memory_space<vmem>>, vector<1x1x128xf32>
    %44 = vector.shape_cast %43 : vector<1x1x128xf32> to vector<1x128xf32>
    %45 = arith.truncf %40 : vector<8x128xf32> to vector<8x128xbf16>
    %cst_25 = arith.constant dense<0.000000e+00> : vector<8x128xf32>
    %46 = tpu.matmul %45, %42, %cst_25 {dimension_numbers = #tpu.dot_dimension_numbers<[1], [0], [0], [1], [0, 0, 1, 1], [], []>} : vector<8x128xbf16>, vector<128x128xbf16>, vector<8x128xf32> -> vector<8x128xf32>
    %47 = vector.broadcast %44 : vector<1x128xf32> to vector<8x128xf32>
    %48 = arith.addf %46, %47 : vector<8x128xf32>
    %cst_26 = arith.constant 5.000000e-01 : f32
    %49 = vector.broadcast %cst_26 : f32 to vector<8x128xf32>
    %50 = arith.mulf %49, %48 : vector<8x128xf32>
    %cst_27 = arith.constant 4.471500e-02 : f32
    %51 = vector.broadcast %cst_27 : f32 to vector<8x128xf32>
    %52 = arith.mulf %51, %48 : vector<8x128xf32>
    %53 = arith.mulf %52, %48 : vector<8x128xf32>
    %54 = arith.mulf %53, %48 : vector<8x128xf32>
    %55 = arith.addf %48, %54 : vector<8x128xf32>
    %cst_28 = arith.constant 0.797884583 : f32
    %56 = vector.broadcast %cst_28 : f32 to vector<8x128xf32>
    %57 = arith.mulf %56, %55 : vector<8x128xf32>
    %58 = math.tanh %57 : vector<8x128xf32>
    %cst_29 = arith.constant 1.000000e+00 : f32
    %59 = vector.broadcast %cst_29 : f32 to vector<8x128xf32>
    %60 = arith.addf %59, %58 : vector<8x128xf32>
    %61 = arith.mulf %50, %60 : vector<8x128xf32>
    %c2_30 = arith.constant 2 : index
    %c0_31 = arith.constant 0 : index
    %c0_32 = arith.constant 0 : index
    %62 = vector.load %arg3[%c2_30, %c0_31, %c0_32] : memref<3x128x128xbf16, #tpu.memory_space<vmem>>, vector<1x128x128xbf16>
    %63 = vector.shape_cast %62 : vector<1x128x128xbf16> to vector<128x128xbf16>
    %c3 = arith.constant 3 : index
    %c0_33 = arith.constant 0 : index
    %c0_34 = arith.constant 0 : index
    %64 = vector.load %arg7[%c3, %c0_33, %c0_34] : memref<4x1x128xf32, #tpu.memory_space<vmem>>, vector<1x1x128xf32>
    %65 = vector.shape_cast %64 : vector<1x1x128xf32> to vector<1x128xf32>
    %66 = arith.truncf %61 : vector<8x128xf32> to vector<8x128xbf16>
    %cst_35 = arith.constant dense<0.000000e+00> : vector<8x128xf32>
    %67 = tpu.matmul %66, %63, %cst_35 {dimension_numbers = #tpu.dot_dimension_numbers<[1], [0], [0], [1], [0, 0, 1, 1], [], []>} : vector<8x128xbf16>, vector<128x128xbf16>, vector<8x128xf32> -> vector<8x128xf32>
    %68 = vector.broadcast %65 : vector<1x128xf32> to vector<8x128xf32>
    %69 = arith.addf %67, %68 : vector<8x128xf32>
    %c0_36 = arith.constant 0 : index
    %c0_37 = arith.constant 0 : index
    %c0_38 = arith.constant 0 : index
    %70 = vector.load %arg4[%c0_36, %c0_37, %c0_38] : memref<3x128x128xbf16, #tpu.memory_space<vmem>>, vector<1x128x128xbf16>
    %71 = vector.shape_cast %70 : vector<1x128x128xbf16> to vector<128x128xbf16>
    %c0_39 = arith.constant 0 : index
    %c0_40 = arith.constant 0 : index
    %c0_41 = arith.constant 0 : index
    %72 = vector.load %arg8[%c0_39, %c0_40, %c0_41] : memref<3x1x128xf32, #tpu.memory_space<vmem>>, vector<1x1x128xf32>
    %73 = vector.shape_cast %72 : vector<1x1x128xf32> to vector<1x128xf32>
    %74 = arith.truncf %69 : vector<8x128xf32> to vector<8x128xbf16>
    %cst_42 = arith.constant dense<0.000000e+00> : vector<8x128xf32>
    %75 = tpu.matmul %74, %71, %cst_42 {dimension_numbers = #tpu.dot_dimension_numbers<[1], [0], [0], [1], [0, 0, 1, 1], [], []>} : vector<8x128xbf16>, vector<128x128xbf16>, vector<8x128xf32> -> vector<8x128xf32>
    %76 = vector.broadcast %73 : vector<1x128xf32> to vector<8x128xf32>
    %77 = arith.addf %75, %76 : vector<8x128xf32>
    %cst_43 = arith.constant 5.000000e-01 : f32
    %78 = vector.broadcast %cst_43 : f32 to vector<8x128xf32>
    %79 = arith.mulf %78, %77 : vector<8x128xf32>
    %cst_44 = arith.constant 4.471500e-02 : f32
    %80 = vector.broadcast %cst_44 : f32 to vector<8x128xf32>
    %81 = arith.mulf %80, %77 : vector<8x128xf32>
    %82 = arith.mulf %81, %77 : vector<8x128xf32>
    %83 = arith.mulf %82, %77 : vector<8x128xf32>
    %84 = arith.addf %77, %83 : vector<8x128xf32>
    %cst_45 = arith.constant 0.797884583 : f32
    %85 = vector.broadcast %cst_45 : f32 to vector<8x128xf32>
    %86 = arith.mulf %85, %84 : vector<8x128xf32>
    %87 = math.tanh %86 : vector<8x128xf32>
    %cst_46 = arith.constant 1.000000e+00 : f32
    %88 = vector.broadcast %cst_46 : f32 to vector<8x128xf32>
    %89 = arith.addf %88, %87 : vector<8x128xf32>
    %90 = arith.mulf %79, %89 : vector<8x128xf32>
    %c1_47 = arith.constant 1 : index
    %c0_48 = arith.constant 0 : index
    %c0_49 = arith.constant 0 : index
    %91 = vector.load %arg4[%c1_47, %c0_48, %c0_49] : memref<3x128x128xbf16, #tpu.memory_space<vmem>>, vector<1x128x128xbf16>
    %92 = vector.shape_cast %91 : vector<1x128x128xbf16> to vector<128x128xbf16>
    %c1_50 = arith.constant 1 : index
    %c0_51 = arith.constant 0 : index
    %c0_52 = arith.constant 0 : index
    %93 = vector.load %arg8[%c1_50, %c0_51, %c0_52] : memref<3x1x128xf32, #tpu.memory_space<vmem>>, vector<1x1x128xf32>
    %94 = vector.shape_cast %93 : vector<1x1x128xf32> to vector<1x128xf32>
    %95 = arith.truncf %90 : vector<8x128xf32> to vector<8x128xbf16>
    %cst_53 = arith.constant dense<0.000000e+00> : vector<8x128xf32>
    %96 = tpu.matmul %95, %92, %cst_53 {dimension_numbers = #tpu.dot_dimension_numbers<[1], [0], [0], [1], [0, 0, 1, 1], [], []>} : vector<8x128xbf16>, vector<128x128xbf16>, vector<8x128xf32> -> vector<8x128xf32>
    %97 = vector.broadcast %94 : vector<1x128xf32> to vector<8x128xf32>
    %98 = arith.addf %96, %97 : vector<8x128xf32>
    %cst_54 = arith.constant 5.000000e-01 : f32
    %99 = vector.broadcast %cst_54 : f32 to vector<8x128xf32>
    %100 = arith.mulf %99, %98 : vector<8x128xf32>
    %cst_55 = arith.constant 4.471500e-02 : f32
    %101 = vector.broadcast %cst_55 : f32 to vector<8x128xf32>
    %102 = arith.mulf %101, %98 : vector<8x128xf32>
    %103 = arith.mulf %102, %98 : vector<8x128xf32>
    %104 = arith.mulf %103, %98 : vector<8x128xf32>
    %105 = arith.addf %98, %104 : vector<8x128xf32>
    %cst_56 = arith.constant 0.797884583 : f32
    %106 = vector.broadcast %cst_56 : f32 to vector<8x128xf32>
    %107 = arith.mulf %106, %105 : vector<8x128xf32>
    %108 = math.tanh %107 : vector<8x128xf32>
    %cst_57 = arith.constant 1.000000e+00 : f32
    %109 = vector.broadcast %cst_57 : f32 to vector<8x128xf32>
    %110 = arith.addf %109, %108 : vector<8x128xf32>
    %111 = arith.mulf %100, %110 : vector<8x128xf32>
    %c2_58 = arith.constant 2 : index
    %c0_59 = arith.constant 0 : index
    %c0_60 = arith.constant 0 : index
    %112 = vector.load %arg4[%c2_58, %c0_59, %c0_60] : memref<3x128x128xbf16, #tpu.memory_space<vmem>>, vector<1x128x128xbf16>
    %113 = vector.shape_cast %112 : vector<1x128x128xbf16> to vector<128x128xbf16>
    %c2_61 = arith.constant 2 : index
    %c0_62 = arith.constant 0 : index
    %c0_63 = arith.constant 0 : index
    %114 = vector.load %arg8[%c2_61, %c0_62, %c0_63] : memref<3x1x128xf32, #tpu.memory_space<vmem>>, vector<1x1x128xf32>
    %115 = vector.shape_cast %114 : vector<1x1x128xf32> to vector<1x128xf32>
    %116 = arith.truncf %111 : vector<8x128xf32> to vector<8x128xbf16>
    %cst_64 = arith.constant dense<0.000000e+00> : vector<8x128xf32>
    %117 = tpu.matmul %116, %113, %cst_64 {dimension_numbers = #tpu.dot_dimension_numbers<[1], [0], [0], [1], [0, 0, 1, 1], [], []>} : vector<8x128xbf16>, vector<128x128xbf16>, vector<8x128xf32> -> vector<8x128xf32>
    %118 = vector.broadcast %115 : vector<1x128xf32> to vector<8x128xf32>
    %119 = arith.addf %117, %118 : vector<8x128xf32>
    %cst_65 = arith.constant 5.000000e-01 : f32
    %120 = vector.broadcast %cst_65 : f32 to vector<8x128xf32>
    %121 = arith.mulf %120, %119 : vector<8x128xf32>
    %cst_66 = arith.constant 4.471500e-02 : f32
    %122 = vector.broadcast %cst_66 : f32 to vector<8x128xf32>
    %123 = arith.mulf %122, %119 : vector<8x128xf32>
    %124 = arith.mulf %123, %119 : vector<8x128xf32>
    %125 = arith.mulf %124, %119 : vector<8x128xf32>
    %126 = arith.addf %119, %125 : vector<8x128xf32>
    %cst_67 = arith.constant 0.797884583 : f32
    %127 = vector.broadcast %cst_67 : f32 to vector<8x128xf32>
    %128 = arith.mulf %127, %126 : vector<8x128xf32>
    %129 = math.tanh %128 : vector<8x128xf32>
    %cst_68 = arith.constant 1.000000e+00 : f32
    %130 = vector.broadcast %cst_68 : f32 to vector<8x128xf32>
    %131 = arith.addf %130, %129 : vector<8x128xf32>
    %132 = arith.mulf %121, %131 : vector<8x128xf32>
    %c0_69 = arith.constant 0 : index
    %c0_70 = arith.constant 0 : index
    %133 = vector.load %arg6[%c0_69, %c0_70] : memref<128x256xbf16, #tpu.memory_space<vmem>>, vector<128x256xbf16>
    %c0_71 = arith.constant 0 : index
    %c0_72 = arith.constant 0 : index
    %134 = vector.load %arg10[%c0_71, %c0_72] : memref<1x256xf32, #tpu.memory_space<vmem>>, vector<1x256xf32>
    %135 = arith.truncf %132 : vector<8x128xf32> to vector<8x128xbf16>
    %cst_73 = arith.constant dense<0.000000e+00> : vector<8x256xf32>
    %136 = tpu.matmul %135, %133, %cst_73 {dimension_numbers = #tpu.dot_dimension_numbers<[1], [0], [0], [1], [0, 0, 1, 1], [], []>} : vector<8x128xbf16>, vector<128x256xbf16>, vector<8x256xf32> -> vector<8x256xf32>
    %137 = vector.broadcast %134 : vector<1x256xf32> to vector<8x256xf32>
    %138 = arith.addf %136, %137 : vector<8x256xf32>
    %c0_74 = arith.constant 0 : index
    %c0_75 = arith.constant 0 : index
    %c0_76 = arith.constant 0 : index
    %139 = vector.load %arg5[%c0_74, %c0_75, %c0_76] : memref<4x128x128xbf16, #tpu.memory_space<vmem>>, vector<1x128x128xbf16>
    %140 = vector.shape_cast %139 : vector<1x128x128xbf16> to vector<128x128xbf16>
    %c0_77 = arith.constant 0 : index
    %c0_78 = arith.constant 0 : index
    %c0_79 = arith.constant 0 : index
    %141 = vector.load %arg9[%c0_77, %c0_78, %c0_79] : memref<4x1x128xf32, #tpu.memory_space<vmem>>, vector<1x1x128xf32>
    %142 = vector.shape_cast %141 : vector<1x1x128xf32> to vector<1x128xf32>
    %143 = arith.truncf %69 : vector<8x128xf32> to vector<8x128xbf16>
    %cst_80 = arith.constant dense<0.000000e+00> : vector<8x128xf32>
    %144 = tpu.matmul %143, %140, %cst_80 {dimension_numbers = #tpu.dot_dimension_numbers<[1], [0], [0], [1], [0, 0, 1, 1], [], []>} : vector<8x128xbf16>, vector<128x128xbf16>, vector<8x128xf32> -> vector<8x128xf32>
    %145 = vector.broadcast %142 : vector<1x128xf32> to vector<8x128xf32>
    %146 = arith.addf %144, %145 : vector<8x128xf32>
    %cst_81 = arith.constant 5.000000e-01 : f32
    %147 = vector.broadcast %cst_81 : f32 to vector<8x128xf32>
    %148 = arith.mulf %147, %146 : vector<8x128xf32>
    %cst_82 = arith.constant 4.471500e-02 : f32
    %149 = vector.broadcast %cst_82 : f32 to vector<8x128xf32>
    %150 = arith.mulf %149, %146 : vector<8x128xf32>
    %151 = arith.mulf %150, %146 : vector<8x128xf32>
    %152 = arith.mulf %151, %146 : vector<8x128xf32>
    %153 = arith.addf %146, %152 : vector<8x128xf32>
    %cst_83 = arith.constant 0.797884583 : f32
    %154 = vector.broadcast %cst_83 : f32 to vector<8x128xf32>
    %155 = arith.mulf %154, %153 : vector<8x128xf32>
    %156 = math.tanh %155 : vector<8x128xf32>
    %cst_84 = arith.constant 1.000000e+00 : f32
    %157 = vector.broadcast %cst_84 : f32 to vector<8x128xf32>
    %158 = arith.addf %157, %156 : vector<8x128xf32>
    %159 = arith.mulf %148, %158 : vector<8x128xf32>
    %c1_85 = arith.constant 1 : index
    %c0_86 = arith.constant 0 : index
    %c0_87 = arith.constant 0 : index
    %160 = vector.load %arg5[%c1_85, %c0_86, %c0_87] : memref<4x128x128xbf16, #tpu.memory_space<vmem>>, vector<1x128x128xbf16>
    %161 = vector.shape_cast %160 : vector<1x128x128xbf16> to vector<128x128xbf16>
    %c1_88 = arith.constant 1 : index
    %c0_89 = arith.constant 0 : index
    %c0_90 = arith.constant 0 : index
    %162 = vector.load %arg9[%c1_88, %c0_89, %c0_90] : memref<4x1x128xf32, #tpu.memory_space<vmem>>, vector<1x1x128xf32>
    %163 = vector.shape_cast %162 : vector<1x1x128xf32> to vector<1x128xf32>
    %164 = arith.truncf %159 : vector<8x128xf32> to vector<8x128xbf16>
    %cst_91 = arith.constant dense<0.000000e+00> : vector<8x128xf32>
    %165 = tpu.matmul %164, %161, %cst_91 {dimension_numbers = #tpu.dot_dimension_numbers<[1], [0], [0], [1], [0, 0, 1, 1], [], []>} : vector<8x128xbf16>, vector<128x128xbf16>, vector<8x128xf32> -> vector<8x128xf32>
    %166 = vector.broadcast %163 : vector<1x128xf32> to vector<8x128xf32>
    %167 = arith.addf %165, %166 : vector<8x128xf32>
    %cst_92 = arith.constant 5.000000e-01 : f32
    %168 = vector.broadcast %cst_92 : f32 to vector<8x128xf32>
    %169 = arith.mulf %168, %167 : vector<8x128xf32>
    %cst_93 = arith.constant 4.471500e-02 : f32
    %170 = vector.broadcast %cst_93 : f32 to vector<8x128xf32>
    %171 = arith.mulf %170, %167 : vector<8x128xf32>
    %172 = arith.mulf %171, %167 : vector<8x128xf32>
    %173 = arith.mulf %172, %167 : vector<8x128xf32>
    %174 = arith.addf %167, %173 : vector<8x128xf32>
    %cst_94 = arith.constant 0.797884583 : f32
    %175 = vector.broadcast %cst_94 : f32 to vector<8x128xf32>
    %176 = arith.mulf %175, %174 : vector<8x128xf32>
    %177 = math.tanh %176 : vector<8x128xf32>
    %cst_95 = arith.constant 1.000000e+00 : f32
    %178 = vector.broadcast %cst_95 : f32 to vector<8x128xf32>
    %179 = arith.addf %178, %177 : vector<8x128xf32>
    %180 = arith.mulf %169, %179 : vector<8x128xf32>
    %c2_96 = arith.constant 2 : index
    %c0_97 = arith.constant 0 : index
    %c0_98 = arith.constant 0 : index
    %181 = vector.load %arg5[%c2_96, %c0_97, %c0_98] : memref<4x128x128xbf16, #tpu.memory_space<vmem>>, vector<1x128x128xbf16>
    %182 = vector.shape_cast %181 : vector<1x128x128xbf16> to vector<128x128xbf16>
    %c2_99 = arith.constant 2 : index
    %c0_100 = arith.constant 0 : index
    %c0_101 = arith.constant 0 : index
    %183 = vector.load %arg9[%c2_99, %c0_100, %c0_101] : memref<4x1x128xf32, #tpu.memory_space<vmem>>, vector<1x1x128xf32>
    %184 = vector.shape_cast %183 : vector<1x1x128xf32> to vector<1x128xf32>
    %185 = arith.truncf %180 : vector<8x128xf32> to vector<8x128xbf16>
    %cst_102 = arith.constant dense<0.000000e+00> : vector<8x128xf32>
    %186 = tpu.matmul %185, %182, %cst_102 {dimension_numbers = #tpu.dot_dimension_numbers<[1], [0], [0], [1], [0, 0, 1, 1], [], []>} : vector<8x128xbf16>, vector<128x128xbf16>, vector<8x128xf32> -> vector<8x128xf32>
    %187 = vector.broadcast %184 : vector<1x128xf32> to vector<8x128xf32>
    %188 = arith.addf %186, %187 : vector<8x128xf32>
    %cst_103 = arith.constant 5.000000e-01 : f32
    %189 = vector.broadcast %cst_103 : f32 to vector<8x128xf32>
    %190 = arith.mulf %189, %188 : vector<8x128xf32>
    %cst_104 = arith.constant 4.471500e-02 : f32
    %191 = vector.broadcast %cst_104 : f32 to vector<8x128xf32>
    %192 = arith.mulf %191, %188 : vector<8x128xf32>
    %193 = arith.mulf %192, %188 : vector<8x128xf32>
    %194 = arith.mulf %193, %188 : vector<8x128xf32>
    %195 = arith.addf %188, %194 : vector<8x128xf32>
    %cst_105 = arith.constant 0.797884583 : f32
    %196 = vector.broadcast %cst_105 : f32 to vector<8x128xf32>
    %197 = arith.mulf %196, %195 : vector<8x128xf32>
    %198 = math.tanh %197 : vector<8x128xf32>
    %cst_106 = arith.constant 1.000000e+00 : f32
    %199 = vector.broadcast %cst_106 : f32 to vector<8x128xf32>
    %200 = arith.addf %199, %198 : vector<8x128xf32>
    %201 = arith.mulf %190, %200 : vector<8x128xf32>
    %c3_107 = arith.constant 3 : index
    %c0_108 = arith.constant 0 : index
    %c0_109 = arith.constant 0 : index
    %202 = vector.load %arg5[%c3_107, %c0_108, %c0_109] : memref<4x128x128xbf16, #tpu.memory_space<vmem>>, vector<1x128x128xbf16>
    %203 = vector.shape_cast %202 : vector<1x128x128xbf16> to vector<128x128xbf16>
    %c3_110 = arith.constant 3 : index
    %c0_111 = arith.constant 0 : index
    %c0_112 = arith.constant 0 : index
    %204 = vector.load %arg9[%c3_110, %c0_111, %c0_112] : memref<4x1x128xf32, #tpu.memory_space<vmem>>, vector<1x1x128xf32>
    %205 = vector.shape_cast %204 : vector<1x1x128xf32> to vector<1x128xf32>
    %206 = arith.truncf %201 : vector<8x128xf32> to vector<8x128xbf16>
    %cst_113 = arith.constant dense<0.000000e+00> : vector<8x128xf32>
    %207 = tpu.matmul %206, %203, %cst_113 {dimension_numbers = #tpu.dot_dimension_numbers<[1], [0], [0], [1], [0, 0, 1, 1], [], []>} : vector<8x128xbf16>, vector<128x128xbf16>, vector<8x128xf32> -> vector<8x128xf32>
    %208 = vector.broadcast %205 : vector<1x128xf32> to vector<8x128xf32>
    %209 = arith.addf %207, %208 : vector<8x128xf32>
    %c0_114 = arith.constant 0 : index
    %c0_115 = arith.constant 0 : index
    %210 = vector.load %arg11[%c0_114, %c0_115] : memref<8x384xf32, #tpu.memory_space<vmem>>, vector<8x256xf32>
    tpu.vector_store %arg11[%c0_114, %c0_115], %138 {strides = array<i32>} : memref<8x384xf32, #tpu.memory_space<vmem>>, vector<8x256xf32>,
    %c0_116 = arith.constant 0 : index
    %c256 = arith.constant 256 : index
    %211 = vector.load %arg11[%c0_116, %c256] : memref<8x384xf32, #tpu.memory_space<vmem>>, vector<8x128xf32>
    tpu.vector_store %arg11[%c0_116, %c256], %209 {strides = array<i32>} : memref<8x384xf32, #tpu.memory_space<vmem>>, vector<8x128xf32>,
    return
  }
  func.func @transform_0(%arg0: i32) -> (i32, i32) {
    %c0_i32 = arith.constant 0 : i32
    %c0_i32_0 = arith.constant 0 : i32
    return %arg0, %c0_i32 : i32, i32
  }
  func.func @transform_1(%arg0: i32) -> (i32, i32) {
    %c0_i32 = arith.constant 0 : i32
    %c0_i32_0 = arith.constant 0 : i32
    %c0_i32_1 = arith.constant 0 : i32
    return %c0_i32, %c0_i32_0 : i32, i32
  }
  func.func @transform_2(%arg0: i32) -> (i32, i32, i32) {
    %c0_i32 = arith.constant 0 : i32
    %c0_i32_0 = arith.constant 0 : i32
    %c0_i32_1 = arith.constant 0 : i32
    %c0_i32_2 = arith.constant 0 : i32
    return %c0_i32, %c0_i32_0, %c0_i32_1 : i32, i32, i32
  }
  func.func @transform_3(%arg0: i32) -> (i32, i32, i32) {
    %c0_i32 = arith.constant 0 : i32
    %c0_i32_0 = arith.constant 0 : i32
    %c0_i32_1 = arith.constant 0 : i32
    %c0_i32_2 = arith.constant 0 : i32
    return %c0_i32, %c0_i32_0, %c0_i32_1 : i32, i32, i32
  }
  func.func @transform_4(%arg0: i32) -> (i32, i32, i32) {
    %c0_i32 = arith.constant 0 : i32
    %c0_i32_0 = arith.constant 0 : i32
    %c0_i32_1 = arith.constant 0 : i32
    %c0_i32_2 = arith.constant 0 : i32
    return %c0_i32, %c0_i32_0, %c0_i32_1 : i32, i32, i32
  }
  func.func @transform_5(%arg0: i32) -> (i32, i32) {
    %c0_i32 = arith.constant 0 : i32
    %c0_i32_0 = arith.constant 0 : i32
    %c0_i32_1 = arith.constant 0 : i32
    return %c0_i32, %c0_i32_0 : i32, i32
  }
  func.func @transform_6(%arg0: i32) -> (i32, i32, i32) {
    %c0_i32 = arith.constant 0 : i32
    %c0_i32_0 = arith.constant 0 : i32
    %c0_i32_1 = arith.constant 0 : i32
    %c0_i32_2 = arith.constant 0 : i32
    return %c0_i32, %c0_i32_0, %c0_i32_1 : i32, i32, i32
  }
  func.func @transform_7(%arg0: i32) -> (i32, i32, i32) {
    %c0_i32 = arith.constant 0 : i32
    %c0_i32_0 = arith.constant 0 : i32
    %c0_i32_1 = arith.constant 0 : i32
    %c0_i32_2 = arith.constant 0 : i32
    return %c0_i32, %c0_i32_0, %c0_i32_1 : i32, i32, i32
  }
  func.func @transform_8(%arg0: i32) -> (i32, i32, i32) {
    %c0_i32 = arith.constant 0 : i32
    %c0_i32_0 = arith.constant 0 : i32
    %c0_i32_1 = arith.constant 0 : i32
    %c0_i32_2 = arith.constant 0 : i32
    return %c0_i32, %c0_i32_0, %c0_i32_1 : i32, i32, i32
  }
  func.func @transform_9(%arg0: i32) -> (i32, i32) {
    %c0_i32 = arith.constant 0 : i32
    %c0_i32_0 = arith.constant 0 : i32
    %c0_i32_1 = arith.constant 0 : i32
    return %c0_i32, %c0_i32_0 : i32, i32
  }
  func.func @transform_10(%arg0: i32) -> (i32, i32) {
    %c0_i32 = arith.constant 0 : i32
    %c0_i32_0 = arith.constant 0 : i32
    return %arg0, %c0_i32 : i32, i32
  }
}

</mosaic_0001>

<llo_original>
// kernel: model_forward.1
$region0: #{model_forward.1}
  #allocation0 [shape = 'u32[]', space=smem, size = 0x4, offset = 0x4, fixed_abs, tag = 'smem constant byte address 0x4 - core index']
  #allocation1 [shape = 'u32[144,128]{1,0:T(1,128)}', space=vmem, size = 0x12000, scoped, tag = 'internal scratch']
  %s0 = inlined_call_operand.vmem [shape: bf16[8,256], index: 0, kind: input, shape index: {}]
  %s1 = inlined_call_operand.hbm [shape: bf16[256,128], index: 1, kind: input, shape index: {}]
  %s2 = inlined_call_operand.hbm [shape: bf16[3,128,128], index: 2, kind: input, shape index: {}]
  %s3 = inlined_call_operand.hbm [shape: bf16[3,128,128], index: 3, kind: input, shape index: {}]
  %s4 = inlined_call_operand.hbm [shape: bf16[4,128,128], index: 4, kind: input, shape index: {}]
  %s5 = inlined_call_operand.hbm [shape: bf16[128,256], index: 5, kind: input, shape index: {}]
  %s6 = inlined_call_operand.vmem [shape: f32[4,1,128], index: 6, kind: input, shape index: {}]
  %s7 = inlined_call_operand.vmem [shape: f32[3,1,128], index: 7, kind: input, shape index: {}]
  %s8 = inlined_call_operand.vmem [shape: f32[4,1,128], index: 8, kind: input, shape index: {}]
  %s9 = inlined_call_operand.vmem [shape: f32[1,256], index: 9, kind: input, shape index: {}]
  %s10 = inlined_call_operand.vmem [shape: f32[8,384], index: 10, kind: output, shape index: {}]
  %s11 = sld [smem:[#allocation0]]
  $region70: #{model_forward.1} parent=0
    _
  %s13 = ssub.s32 1, %s11
  %s14 = scalar_select 0, %s13, %s11
  $region1: #{model_forward.1} parent=0
    #allocation2 [shape = 'u8[65536]{0}', space=vmem, size = 0x10000, scoped, tag = 'input window, operand 1, single buffered']
    #allocation3 [shape = 's32[1]{0}', space=sflag, size = 0x4, scoped, tag = 'scoped memory for model_forward.1']
    #allocation4 [shape = 'u8[98304]{0}', space=vmem, size = 0x18000, scoped, tag = 'input window, operand 2, single buffered']
    #allocation5 [shape = 's32[1]{0}', space=sflag, size = 0x4, scoped, tag = 'scoped memory for model_forward.1']
    #allocation6 [shape = 'u8[98304]{0}', space=vmem, size = 0x18000, scoped, tag = 'input window, operand 3, single buffered']
    #allocation7 [shape = 'u8[131072]{0}', space=vmem, size = 0x20000, scoped, tag = 'input window, operand 4, single buffered']
    #allocation8 [shape = 's32[1]{0}', space=sflag, size = 0x4, scoped, tag = 'scoped memory for model_forward.1']
    #allocation9 [shape = 'u8[65536]{0}', space=vmem, size = 0x10000, scoped, tag = 'input window, operand 5, single buffered']
    %15 = vsyncpa [#allocation3], 0
    %16 = vsyncpa [#allocation5], 0
    %17 = vsyncpa [#allocation8], 0
    // Predicated region
    $region2: #{model_forward.1} parent=1 // pred_check
      _
    $region3: #{model_forward.1} parent=1 // pred_check_branch
      %19 = sbr.rel (0) target = $region5
    $region4: #{model_forward.1} parent=1 // pred_region
      _
    $region5: #{model_forward.1} parent=1 // pred_fallthru
      _
    // Predicated region
    $region6: #{model_forward.1} parent=1 // pred_check
      _
    $region7: #{model_forward.1} parent=1 // pred_check_branch
      %21 = sbr.rel (0) target = $region9
    $region8: #{model_forward.1} parent=1 // pred_region
      %s23 = ssub.s32 2048, 2048
      %24 = vsyncadd [#allocation3], %s23
      %s25 = sshll.u32 [#allocation2], 4
      %s26 = int_to_ptr.vmem [resolvable:$true] %s25
      %31 = dma.hbm_to_vmem [thread:$0]  %s1, 2048, %s26, [#allocation3], 64, 64, 4
    $region9: #{model_forward.1} parent=1 // pred_fallthru
      _
    // Predicated region
    $region10: #{model_forward.1} parent=1 // pred_check
      _
    $region11: #{model_forward.1} parent=1 // pred_check_branch
      %33 = sbr.rel (0) target = $region13
    $region12: #{model_forward.1} parent=1 // pred_region
      %s35 = ssub.s32 3072, 3072
      %36 = vsyncadd [#allocation5], %s35
      %s37 = sshll.u32 [#allocation4], 4
      %s38 = int_to_ptr.vmem [resolvable:$true] %s37
      %43 = dma.hbm_to_vmem [thread:$0]  %s2, 3072, %s38, [#allocation5], 64, 64, 4
    $region13: #{model_forward.1} parent=1 // pred_fallthru
      _
    // Predicated region
    $region14: #{model_forward.1} parent=1 // pred_check
      _
    $region15: #{model_forward.1} parent=1 // pred_check_branch
      %45 = sbr.rel (0) target = $region17
    $region16: #{model_forward.1} parent=1 // pred_region
      %s47 = ssub.s32 3072, 3072
      %48 = vsyncadd [#allocation5], %s47
      %s49 = sshll.u32 [#allocation6], 4
      %s50 = int_to_ptr.vmem [resolvable:$true] %s49
      %55 = dma.hbm_to_vmem [thread:$0]  %s3, 3072, %s50, [#allocation5], 64, 64, 4
    $region17: #{model_forward.1} parent=1 // pred_fallthru
      _
    // Predicated region
    $region18: #{model_forward.1} parent=1 // pred_check
      _
    $region19: #{model_forward.1} parent=1 // pred_check_branch
      %57 = sbr.rel (0) target = $region21
    $region20: #{model_forward.1} parent=1 // pred_region
      %s59 = ssub.s32 4096, 4096
      %60 = vsyncadd [#allocation8], %s59
      %s61 = sshll.u32 [#allocation7], 4
      %s62 = int_to_ptr.vmem [resolvable:$true] %s61
      %67 = dma.hbm_to_vmem [thread:$0]  %s4, 4096, %s62, [#allocation8], 64, 64, 4
    $region21: #{model_forward.1} parent=1 // pred_fallthru
      _
    // Predicated region
    $region22: #{model_forward.1} parent=1 // pred_check
      _
    $region23: #{model_forward.1} parent=1 // pred_check_branch
      %69 = sbr.rel (0) target = $region25
    $region24: #{model_forward.1} parent=1 // pred_region
      %s71 = ssub.s32 2048, 2048
      %72 = vsyncadd [#allocation8], %s71
      %s73 = sshll.u32 [#allocation9], 4
      %s74 = int_to_ptr.vmem [resolvable:$true] %s73
      %79 = dma.hbm_to_vmem [thread:$0]  %s5, 2048, %s74, [#allocation8], 128, 128, 8
    $region25: #{model_forward.1} parent=1 // pred_fallthru
      _
    // Predicated region
    $region26: #{model_forward.1} parent=1 // pred_check
      _
    $region27: #{model_forward.1} parent=1 // pred_check_branch
      %81 = sbr.rel (0) target = $region29
    $region28: #{model_forward.1} parent=1 // pred_region
      _
    $region29: #{model_forward.1} parent=1 // pred_fallthru
      _
    // Predicated region
    $region30: #{model_forward.1} parent=1 // pred_check
      _
    $region31: #{model_forward.1} parent=1 // pred_check_branch
      %83 = sbr.rel (0) target = $region33
    $region32: #{model_forward.1} parent=1 // pred_region
      _
    $region33: #{model_forward.1} parent=1 // pred_fallthru
      _
    // Predicated region
    $region34: #{model_forward.1} parent=1 // pred_check
      _
    $region35: #{model_forward.1} parent=1 // pred_check_branch
      %85 = sbr.rel (0) target = $region37
    $region36: #{model_forward.1} parent=1 // pred_region
      _
    $region37: #{model_forward.1} parent=1 // pred_fallthru
      _
    // Predicated region
    $region38: #{model_forward.1} parent=1 // pred_check
      _
    $region39: #{model_forward.1} parent=1 // pred_check_branch
      %87 = sbr.rel (0) target = $region41
    $region40: #{model_forward.1} parent=1 // pred_region
      _
    $region41: #{model_forward.1} parent=1 // pred_fallthru
      _
    // Predicated region
    $region42: #{model_forward.1} parent=1 // pred_check
      _
    $region43: #{model_forward.1} parent=1 // pred_check_branch
      %89 = sbr.rel (0) target = $region45
    $region44: #{model_forward.1} parent=1 // pred_region
      %90 = dma.done [#allocation3], 2048
    $region45: #{model_forward.1} parent=1 // pred_fallthru
      _
    // Predicated region
    $region46: #{model_forward.1} parent=1 // pred_check
      _
    $region47: #{model_forward.1} parent=1 // pred_check_branch
      %92 = sbr.rel (0) target = $region49
    $region48: #{model_forward.1} parent=1 // pred_region
      %93 = dma.done [#allocation5], 3072
    $region49: #{model_forward.1} parent=1 // pred_fallthru
      _
    // Predicated region
    $region50: #{model_forward.1} parent=1 // pred_check
      _
    $region51: #{model_forward.1} parent=1 // pred_check_branch
      %95 = sbr.rel (0) target = $region53
    $region52: #{model_forward.1} parent=1 // pred_region
      %96 = dma.done [#allocation5], 3072
    $region53: #{model_forward.1} parent=1 // pred_fallthru
      _
    // Predicated region
    $region54: #{model_forward.1} parent=1 // pred_check
      _
    $region55: #{model_forward.1} parent=1 // pred_check_branch
      %98 = sbr.rel (0) target = $region57
    $region56: #{model_forward.1} parent=1 // pred_region
      %99 = dma.done [#allocation8], 4096
    $region57: #{model_forward.1} parent=1 // pred_fallthru
      _
    // Predicated region
    $region58: #{model_forward.1} parent=1 // pred_check
      _
    $region59: #{model_forward.1} parent=1 // pred_check_branch
      %101 = sbr.rel (0) target = $region61
    $region60: #{model_forward.1} parent=1 // pred_region
      %102 = dma.done [#allocation8], 2048
    $region61: #{model_forward.1} parent=1 // pred_fallthru
      _
    %v104 = vld [vmem:[%s0] sm:$0xff]
    %v105 = vld [vmem:[#allocation2] sm:$0xf]
    %v106 = vld [vmem:[#allocation2 + $0x4] sm:$0xf]
    %v107 = vld [vmem:[#allocation2 + $0x8] sm:$0xf]
    %v108 = vld [vmem:[#allocation2 + $0xc] sm:$0xf]
    %v109 = vld [vmem:[#allocation2 + $0x10] sm:$0xf]
    %v110 = vld [vmem:[#allocation2 + $0x14] sm:$0xf]
    %v111 = vld [vmem:[#allocation2 + $0x18] sm:$0xf]
    %v112 = vld [vmem:[#allocation2 + $0x1c] sm:$0xf]
    %v113 = vld [vmem:[#allocation2 + $0x20] sm:$0xf]
    %v114 = vld [vmem:[#allocation2 + $0x24] sm:$0xf]
    %v115 = vld [vmem:[#allocation2 + $0x28] sm:$0xf]
    %v116 = vld [vmem:[#allocation2 + $0x2c] sm:$0xf]
    %v117 = vld [vmem:[#allocation2 + $0x30] sm:$0xf]
    %v118 = vld [vmem:[#allocation2 + $0x34] sm:$0xf]
    %v119 = vld [vmem:[#allocation2 + $0x38] sm:$0xf]
    %v120 = vld [vmem:[#allocation2 + $0x3c] sm:$0xf]
    %v121 = vld [vmem:[#allocation2 + $0x40] sm:$0xf]
    %v122 = vld [vmem:[#allocation2 + $0x44] sm:$0xf]
    %v123 = vld [vmem:[#allocation2 + $0x48] sm:$0xf]
    %v124 = vld [vmem:[#allocation2 + $0x4c] sm:$0xf]
    %v125 = vld [vmem:[#allocation2 + $0x50] sm:$0xf]
    %v126 = vld [vmem:[#allocation2 + $0x54] sm:$0xf]
    %v127 = vld [vmem:[#allocation2 + $0x58] sm:$0xf]
    %v128 = vld [vmem:[#allocation2 + $0x5c] sm:$0xf]
    %v129 = vld [vmem:[#allocation2 + $0x60] sm:$0xf]
    %v130 = vld [vmem:[#allocation2 + $0x64] sm:$0xf]
    %v131 = vld [vmem:[#allocation2 + $0x68] sm:$0xf]
    %v132 = vld [vmem:[#allocation2 + $0x6c] sm:$0xf]
    %v133 = vld [vmem:[#allocation2 + $0x70] sm:$0xf]
    %v134 = vld [vmem:[#allocation2 + $0x74] sm:$0xf]
    %v135 = vld [vmem:[#allocation2 + $0x78] sm:$0xf]
    %v136 = vld [vmem:[#allocation2 + $0x7c] sm:$0xf]
    %v137 = vld [vmem:[%s6] sm:$0x1]
    %v139 = vlaneseq
    %v140 = vshrl.u32 %v139, 7
    %v141 = vsub.s32 0, %v140
    %v142 = vrot.slane %v137, %v141
    %v145 = vunpack.c.l.b16 %v104
    %v146 = vunpack.c.h.b16 %v104
    %v147 = vpack.c.b16 %v145, %v145
    %v148 = vpack.c.b16 %v146, %v146
    %v183 = vunpack.c.l.b16 %v105
    %v184 = vunpack.c.l.b16 %v106
    %v185 = vunpack.c.l.b16 %v107
    %v186 = vunpack.c.l.b16 %v108
    %v187 = vunpack.c.l.b16 %v109
    %v188 = vunpack.c.l.b16 %v110
    %v189 = vunpack.c.l.b16 %v111
    %v190 = vunpack.c.l.b16 %v112
    %v191 = vunpack.c.l.b16 %v113
    %v192 = vunpack.c.l.b16 %v114
    %v193 = vunpack.c.l.b16 %v115
    %v194 = vunpack.c.l.b16 %v116
    %v195 = vunpack.c.l.b16 %v117
    %v196 = vunpack.c.l.b16 %v118
    %v197 = vunpack.c.l.b16 %v119
    %v198 = vunpack.c.l.b16 %v120
    %v199 = vunpack.c.l.b16 %v121
    %v200 = vunpack.c.l.b16 %v122
    %v201 = vunpack.c.l.b16 %v123
    %v202 = vunpack.c.l.b16 %v124
    %v203 = vunpack.c.l.b16 %v125
    %v204 = vunpack.c.l.b16 %v126
    %v205 = vunpack.c.l.b16 %v127
    %v206 = vunpack.c.l.b16 %v128
    %v207 = vunpack.c.l.b16 %v129
    %v208 = vunpack.c.l.b16 %v130
    %v209 = vunpack.c.l.b16 %v131
    %v210 = vunpack.c.l.b16 %v132
    %v211 = vunpack.c.l.b16 %v133
    %v212 = vunpack.c.l.b16 %v134
    %v213 = vunpack.c.l.b16 %v135
    %v214 = vunpack.c.l.b16 %v136
    %v215 = vpack.c.b16 %v184, %v183
    %v216 = vpack.c.b16 %v186, %v185
    %v217 = vpack.c.b16 %v188, %v187
    %v218 = vpack.c.b16 %v190, %v189
    %v219 = vpack.c.b16 %v192, %v191
    %v220 = vpack.c.b16 %v194, %v193
    %v221 = vpack.c.b16 %v196, %v195
    %v222 = vpack.c.b16 %v198, %v197
    %v223 = vpack.c.b16 %v200, %v199
    %v224 = vpack.c.b16 %v202, %v201
    %v225 = vpack.c.b16 %v204, %v203
    %v226 = vpack.c.b16 %v206, %v205
    %v227 = vpack.c.b16 %v208, %v207
    %v228 = vpack.c.b16 %v210, %v209
    %v229 = vpack.c.b16 %v212, %v211
    %v230 = vpack.c.b16 %v214, %v213
    %247 = vmatprep.subr.bf16.mxu0 0
    %248 = vmatpush1.bf16.msra.mxu0 %v215
    %249 = vmatprep.subr.bf16.mxu0 0
    %250 = vmatpush1.bf16.msra.mxu0 %v216
    %251 = vmatprep.subr.bf16.mxu0 0
    %252 = vmatpush1.bf16.msra.mxu0 %v217
    %253 = vmatprep.subr.bf16.mxu0 0
    %254 = vmatpush1.bf16.msra.mxu0 %v218
    %255 = vmatprep.subr.bf16.mxu0 0
    %256 = vmatpush1.bf16.msra.mxu0 %v219
    %257 = vmatprep.subr.bf16.mxu0 0
    %258 = vmatpush1.bf16.msra.mxu0 %v220
    %259 = vmatprep.subr.bf16.mxu0 0
    %260 = vmatpush1.bf16.msra.mxu0 %v221
    %261 = vmatprep.subr.bf16.mxu0 0
    %262 = vmatpush1.bf16.msra.mxu0 %v222
    %263 = vmatprep.subr.bf16.mxu0 0
    %264 = vmatpush1.bf16.msra.mxu0 %v223
    %265 = vmatprep.subr.bf16.mxu0 0
    %266 = vmatpush1.bf16.msra.mxu0 %v224
    %267 = vmatprep.subr.bf16.mxu0 0
    %268 = vmatpush1.bf16.msra.mxu0 %v225
    %269 = vmatprep.subr.bf16.mxu0 0
    %270 = vmatpush1.bf16.msra.mxu0 %v226
    %271 = vmatprep.subr.bf16.mxu0 0
    %272 = vmatpush1.bf16.msra.mxu0 %v227
    %273 = vmatprep.subr.bf16.mxu0 0
    %274 = vmatpush1.bf16.msra.mxu0 %v228
    %275 = vmatprep.subr.bf16.mxu0 0
    %276 = vmatpush1.bf16.msra.mxu0 %v229
    %277 = vmatprep.subr.bf16.mxu0 0
    %278 = vmatpush1.bf16.msra.mxu0 %v230
    %279 = vmatprep.mubr.bf16.mxu0 %v148
    %280 = vmatmul.mubr.bf16.gmra.mrb[0].mxu0 %v147
    %v281 = vpop.f32.mrb[0].mxu0
    %v282 = vadd.f32 %v142, %v281
    %v283 = vpop.f32.mrb[0].mxu0
    %v284 = vpop.f32.mrb[0].mxu0
    %v285 = vpop.f32.mrb[0].mxu0
    %286 = vdwg.mxu0
    %v287 = vmul.f32 %v282, 0.5
    %v288 = vmul.f32 %v282, 0.044715
    %v289 = vmul.f32 %v288, %v282
    %v290 = vmul.f32 %v289, %v282
    %v291 = vadd.f32 %v282, %v290
    %v292 = vmul.f32 %v291, 0.7978846
    %v293 = vtanh.pop %v292
    %v294 = vadd.f32 %v293, 1.0
    %v295 = vmul.f32 %v287, %v294
    %v296 = vld [vmem:[#allocation4] sm:$0xf]
    %v297 = vld [vmem:[#allocation4 + $0x4] sm:$0xf]
    %v298 = vld [vmem:[#allocation4 + $0x8] sm:$0xf]
    %v299 = vld [vmem:[#allocation4 + $0xc] sm:$0xf]
    %v300 = vld [vmem:[#allocation4 + $0x10] sm:$0xf]
    %v301 = vld [vmem:[#allocation4 + $0x14] sm:$0xf]
    %v302 = vld [vmem:[#allocation4 + $0x18] sm:$0xf]
    %v303 = vld [vmem:[#allocation4 + $0x1c] sm:$0xf]
    %v304 = vld [vmem:[#allocation4 + $0x20] sm:$0xf]
    %v305 = vld [vmem:[#allocation4 + $0x24] sm:$0xf]
    %v306 = vld [vmem:[#allocation4 + $0x28] sm:$0xf]
    %v307 = vld [vmem:[#allocation4 + $0x2c] sm:$0xf]
    %v308 = vld [vmem:[#allocation4 + $0x30] sm:$0xf]
    %v309 = vld [vmem:[#allocation4 + $0x34] sm:$0xf]
    %v310 = vld [vmem:[#allocation4 + $0x38] sm:$0xf]
    %v311 = vld [vmem:[#allocation4 + $0x3c] sm:$0xf]
    %s312 = scalar_lea.vmem %s6, 1
    %v313 = vld [vmem:[%s312] sm:$0x1]
    %v314 = vpack.c.bf16 %v295, %v295
    %v316 = vlaneseq
    %v317 = vshrl.u32 %v316, 7
    %v318 = vsub.s32 0, %v317
    %v319 = vrot.slane %v313, %v318
    %v337 = vunpack.c.l.b16 %v296
    %v338 = vunpack.c.l.b16 %v297
    %v339 = vunpack.c.l.b16 %v298
    %v340 = vunpack.c.l.b16 %v299
    %v341 = vunpack.c.l.b16 %v300
    %v342 = vunpack.c.l.b16 %v301
    %v343 = vunpack.c.l.b16 %v302
    %v344 = vunpack.c.l.b16 %v303
    %v345 = vunpack.c.l.b16 %v304
    %v346 = vunpack.c.l.b16 %v305
    %v347 = vunpack.c.l.b16 %v306
    %v348 = vunpack.c.l.b16 %v307
    %v349 = vunpack.c.l.b16 %v308
    %v350 = vunpack.c.l.b16 %v309
    %v351 = vunpack.c.l.b16 %v310
    %v352 = vunpack.c.l.b16 %v311
    %v353 = vpack.c.b16 %v338, %v337
    %v354 = vpack.c.b16 %v340, %v339
    %v355 = vpack.c.b16 %v342, %v341
    %v356 = vpack.c.b16 %v344, %v343
    %v357 = vpack.c.b16 %v346, %v345
    %v358 = vpack.c.b16 %v348, %v347
    %v359 = vpack.c.b16 %v350, %v349
    %v360 = vpack.c.b16 %v352, %v351
    %369 = vmatprep.subr.bf16.mxu0 0
    %370 = vmatpush1.bf16.msra.mxu0 %v353
    %371 = vmatprep.subr.bf16.mxu0 0
    %372 = vmatpush1.bf16.msra.mxu0 %v354
    %373 = vmatprep.subr.bf16.mxu0 0
    %374 = vmatpush1.bf16.msra.mxu0 %v355
    %375 = vmatprep.subr.bf16.mxu0 0
    %376 = vmatpush1.bf16.msra.mxu0 %v356
    %377 = vmatprep.subr.bf16.mxu0 0
    %378 = vmatpush1.bf16.msra.mxu0 %v357
    %379 = vmatprep.subr.bf16.mxu0 0
    %380 = vmatpush1.bf16.msra.mxu0 %v358
    %381 = vmatprep.subr.bf16.mxu0 0
    %382 = vmatpush1.bf16.msra.mxu0 %v359
    %383 = vmatprep.subr.bf16.mxu0 0
    %384 = vmatpush1.bf16.msra.mxu0 %v360
    %385 = vmatprep.subr.bf16.mxu0 0
    %386 = vmatpush1.bf16.msra.mxu0 0
    %387 = vmatprep.subr.bf16.mxu0 0
    %388 = vmatpush1.bf16.msra.mxu0 0
    %389 = vmatprep.subr.bf16.mxu0 0
    %390 = vmatpush1.bf16.msra.mxu0 0
    %391 = vmatprep.subr.bf16.mxu0 0
    %392 = vmatpush1.bf16.msra.mxu0 0
    %393 = vmatprep.subr.bf16.mxu0 0
    %394 = vmatpush1.bf16.msra.mxu0 0
    %395 = vmatprep.subr.bf16.mxu0 0
    %396 = vmatpush1.bf16.msra.mxu0 0
    %397 = vmatprep.subr.bf16.mxu0 0
    %398 = vmatpush1.bf16.msra.mxu0 0
    %399 = vmatprep.subr.bf16.mxu0 0
    %400 = vmatpush1.bf16.msra.mxu0 0
    %401 = vmatprep.mubr.bf16.mxu0 0
    %402 = vmatmul.mubr.bf16.gmra.mrb[0].mxu0 %v314
    %v403 = vpop.f32.mrb[0].mxu0
    %v404 = vadd.f32 %v319, %v403
    %v405 = vpop.f32.mrb[0].mxu0
    %v406 = vpop.f32.mrb[0].mxu0
    %v407 = vpop.f32.mrb[0].mxu0
    %408 = vdwg.mxu0
    %v409 = vmul.f32 %v404, 0.5
    %v410 = vmul.f32 %v404, 0.044715
    %v411 = vmul.f32 %v410, %v404
    %v412 = vmul.f32 %v411, %v404
    %v413 = vadd.f32 %v404, %v412
    %v414 = vmul.f32 %v413, 0.7978846
    %v415 = vtanh.pop %v414
    %v416 = vadd.f32 %v415, 1.0
    %v417 = vmul.f32 %v409, %v416
    %s418 = scalar_lea.vmem [#allocation4], 64
    %v419 = vld [vmem:[%s418] sm:$0xf]
    %v420 = vld [vmem:[%s418 + $0x4] sm:$0xf]
    %v421 = vld [vmem:[%s418 + $0x8] sm:$0xf]
    %v422 = vld [vmem:[%s418 + $0xc] sm:$0xf]
    %v423 = vld [vmem:[%s418 + $0x10] sm:$0xf]
    %v424 = vld [vmem:[%s418 + $0x14] sm:$0xf]
    %v425 = vld [vmem:[%s418 + $0x18] sm:$0xf]
    %v426 = vld [vmem:[%s418 + $0x1c] sm:$0xf]
    %v427 = vld [vmem:[%s418 + $0x20] sm:$0xf]
    %v428 = vld [vmem:[%s418 + $0x24] sm:$0xf]
    %v429 = vld [vmem:[%s418 + $0x28] sm:$0xf]
    %v430 = vld [vmem:[%s418 + $0x2c] sm:$0xf]
    %v431 = vld [vmem:[%s418 + $0x30] sm:$0xf]
    %v432 = vld [vmem:[%s418 + $0x34] sm:$0xf]
    %v433 = vld [vmem:[%s418 + $0x38] sm:$0xf]
    %v434 = vld [vmem:[%s418 + $0x3c] sm:$0xf]
    %s435 = scalar_lea.vmem %s6, 2
    %v436 = vld [vmem:[%s435] sm:$0x1]
    %v437 = vpack.c.bf16 %v417, %v417
    %v439 = vlaneseq
    %v440 = vshrl.u32 %v439, 7
    %v441 = vsub.s32 0, %v440
    %v442 = vrot.slane %v436, %v441
    %v460 = vunpack.c.l.b16 %v419
    %v461 = vunpack.c.l.b16 %v420
    %v462 = vunpack.c.l.b16 %v421
    %v463 = vunpack.c.l.b16 %v422
    %v464 = vunpack.c.l.b16 %v423
    %v465 = vunpack.c.l.b16 %v424
    %v466 = vunpack.c.l.b16 %v425
    %v467 = vunpack.c.l.b16 %v426
    %v468 = vunpack.c.l.b16 %v427
    %v469 = vunpack.c.l.b16 %v428
    %v470 = vunpack.c.l.b16 %v429
    %v471 = vunpack.c.l.b16 %v430
    %v472 = vunpack.c.l.b16 %v431
    %v473 = vunpack.c.l.b16 %v432
    %v474 = vunpack.c.l.b16 %v433
    %v475 = vunpack.c.l.b16 %v434
    %v476 = vpack.c.b16 %v461, %v460
    %v477 = vpack.c.b16 %v463, %v462
    %v478 = vpack.c.b16 %v465, %v464
    %v479 = vpack.c.b16 %v467, %v466
    %v480 = vpack.c.b16 %v469, %v468
    %v481 = vpack.c.b16 %v471, %v470
    %v482 = vpack.c.b16 %v473, %v472
    %v483 = vpack.c.b16 %v475, %v474
    %492 = vmatprep.subr.bf16.mxu0 0
    %493 = vmatpush1.bf16.msra.mxu0 %v476
    %494 = vmatprep.subr.bf16.mxu0 0
    %495 = vmatpush1.bf16.msra.mxu0 %v477
    %496 = vmatprep.subr.bf16.mxu0 0
    %497 = vmatpush1.bf16.msra.mxu0 %v478
    %498 = vmatprep.subr.bf16.mxu0 0
    %499 = vmatpush1.bf16.msra.mxu0 %v479
    %500 = vmatprep.subr.bf16.mxu0 0
    %501 = vmatpush1.bf16.msra.mxu0 %v480
    %502 = vmatprep.subr.bf16.mxu0 0
    %503 = vmatpush1.bf16.msra.mxu0 %v481
    %504 = vmatprep.subr.bf16.mxu0 0
    %505 = vmatpush1.bf16.msra.mxu0 %v482
    %506 = vmatprep.subr.bf16.mxu0 0
    %507 = vmatpush1.bf16.msra.mxu0 %v483
    %508 = vmatprep.subr.bf16.mxu0 0
    %509 = vmatpush1.bf16.msra.mxu0 0
    %510 = vmatprep.subr.bf16.mxu0 0
    %511 = vmatpush1.bf16.msra.mxu0 0
    %512 = vmatprep.subr.bf16.mxu0 0
    %513 = vmatpush1.bf16.msra.mxu0 0
    %514 = vmatprep.subr.bf16.mxu0 0
    %515 = vmatpush1.bf16.msra.mxu0 0
    %516 = vmatprep.subr.bf16.mxu0 0
    %517 = vmatpush1.bf16.msra.mxu0 0
    %518 = vmatprep.subr.bf16.mxu0 0
    %519 = vmatpush1.bf16.msra.mxu0 0
    %520 = vmatprep.subr.bf16.mxu0 0
    %521 = vmatpush1.bf16.msra.mxu0 0
    %522 = vmatprep.subr.bf16.mxu0 0
    %523 = vmatpush1.bf16.msra.mxu0 0
    %524 = vmatprep.mubr.bf16.mxu0 0
    %525 = vmatmul.mubr.bf16.gmra.mrb[0].mxu0 %v437
    %v526 = vpop.f32.mrb[0].mxu0
    %v527 = vadd.f32 %v442, %v526
    %v528 = vpop.f32.mrb[0].mxu0
    %v529 = vpop.f32.mrb[0].mxu0
    %v530 = vpop.f32.mrb[0].mxu0
    %531 = vdwg.mxu0
    %v532 = vmul.f32 %v527, 0.5
    %v533 = vmul.f32 %v527, 0.044715
    %v534 = vmul.f32 %v533, %v527
    %v535 = vmul.f32 %v534, %v527
    %v536 = vadd.f32 %v527, %v535
    %v537 = vmul.f32 %v536, 0.7978846
    %v538 = vtanh.pop %v537
    %v539 = vadd.f32 %v538, 1.0
    %v540 = vmul.f32 %v532, %v539
    %s541 = scalar_lea.vmem [#allocation4], 128
    %v542 = vld [vmem:[%s541] sm:$0xf]
    %v543 = vld [vmem:[%s541 + $0x4] sm:$0xf]
    %v544 = vld [vmem:[%s541 + $0x8] sm:$0xf]
    %v545 = vld [vmem:[%s541 + $0xc] sm:$0xf]
    %v546 = vld [vmem:[%s541 + $0x10] sm:$0xf]
    %v547 = vld [vmem:[%s541 + $0x14] sm:$0xf]
    %v548 = vld [vmem:[%s541 + $0x18] sm:$0xf]
    %v549 = vld [vmem:[%s541 + $0x1c] sm:$0xf]
    %v550 = vld [vmem:[%s541 + $0x20] sm:$0xf]
    %v551 = vld [vmem:[%s541 + $0x24] sm:$0xf]
    %v552 = vld [vmem:[%s541 + $0x28] sm:$0xf]
    %v553 = vld [vmem:[%s541 + $0x2c] sm:$0xf]
    %v554 = vld [vmem:[%s541 + $0x30] sm:$0xf]
    %v555 = vld [vmem:[%s541 + $0x34] sm:$0xf]
    %v556 = vld [vmem:[%s541 + $0x38] sm:$0xf]
    %v557 = vld [vmem:[%s541 + $0x3c] sm:$0xf]
    %s558 = scalar_lea.vmem %s6, 3
    %v559 = vld [vmem:[%s558] sm:$0x1]
    %v560 = vpack.c.bf16 %v540, %v540
    %v562 = vlaneseq
    %v563 = vshrl.u32 %v562, 7
    %v564 = vsub.s32 0, %v563
    %v565 = vrot.slane %v559, %v564
    %v583 = vunpack.c.l.b16 %v542
    %v584 = vunpack.c.l.b16 %v543
    %v585 = vunpack.c.l.b16 %v544
    %v586 = vunpack.c.l.b16 %v545
    %v587 = vunpack.c.l.b16 %v546
    %v588 = vunpack.c.l.b16 %v547
    %v589 = vunpack.c.l.b16 %v548
    %v590 = vunpack.c.l.b16 %v549
    %v591 = vunpack.c.l.b16 %v550
    %v592 = vunpack.c.l.b16 %v551
    %v593 = vunpack.c.l.b16 %v552
    %v594 = vunpack.c.l.b16 %v553
    %v595 = vunpack.c.l.b16 %v554
    %v596 = vunpack.c.l.b16 %v555
    %v597 = vunpack.c.l.b16 %v556
    %v598 = vunpack.c.l.b16 %v557
    %v599 = vpack.c.b16 %v584, %v583
    %v600 = vpack.c.b16 %v586, %v585
    %v601 = vpack.c.b16 %v588, %v587
    %v602 = vpack.c.b16 %v590, %v589
    %v603 = vpack.c.b16 %v592, %v591
    %v604 = vpack.c.b16 %v594, %v593
    %v605 = vpack.c.b16 %v596, %v595
    %v606 = vpack.c.b16 %v598, %v597
    %615 = vmatprep.subr.bf16.mxu0 0
    %616 = vmatpush1.bf16.msra.mxu0 %v599
    %617 = vmatprep.subr.bf16.mxu0 0
    %618 = vmatpush1.bf16.msra.mxu0 %v600
    %619 = vmatprep.subr.bf16.mxu0 0
    %620 = vmatpush1.bf16.msra.mxu0 %v601
    %621 = vmatprep.subr.bf16.mxu0 0
    %622 = vmatpush1.bf16.msra.mxu0 %v602
    %623 = vmatprep.subr.bf16.mxu0 0
    %624 = vmatpush1.bf16.msra.mxu0 %v603
    %625 = vmatprep.subr.bf16.mxu0 0
    %626 = vmatpush1.bf16.msra.mxu0 %v604
    %627 = vmatprep.subr.bf16.mxu0 0
    %628 = vmatpush1.bf16.msra.mxu0 %v605
    %629 = vmatprep.subr.bf16.mxu0 0
    %630 = vmatpush1.bf16.msra.mxu0 %v606
    %631 = vmatprep.subr.bf16.mxu0 0
    %632 = vmatpush1.bf16.msra.mxu0 0
    %633 = vmatprep.subr.bf16.mxu0 0
    %634 = vmatpush1.bf16.msra.mxu0 0
    %635 = vmatprep.subr.bf16.mxu0 0
    %636 = vmatpush1.bf16.msra.mxu0 0
    %637 = vmatprep.subr.bf16.mxu0 0
    %638 = vmatpush1.bf16.msra.mxu0 0
    %639 = vmatprep.subr.bf16.mxu0 0
    %640 = vmatpush1.bf16.msra.mxu0 0
    %641 = vmatprep.subr.bf16.mxu0 0
    %642 = vmatpush1.bf16.msra.mxu0 0
    %643 = vmatprep.subr.bf16.mxu0 0
    %644 = vmatpush1.bf16.msra.mxu0 0
    %645 = vmatprep.subr.bf16.mxu0 0
    %646 = vmatpush1.bf16.msra.mxu0 0
    %647 = vmatprep.mubr.bf16.mxu0 0
    %648 = vmatmul.mubr.bf16.gmra.mrb[0].mxu0 %v560
    %v649 = vpop.f32.mrb[0].mxu0
    %v650 = vadd.f32 %v565, %v649
    %v651 = vpop.f32.mrb[0].mxu0
    %v652 = vpop.f32.mrb[0].mxu0
    %v653 = vpop.f32.mrb[0].mxu0
    %654 = vdwg.mxu0
    %v655 = vld [vmem:[#allocation6] sm:$0xf]
    %v656 = vld [vmem:[#allocation6 + $0x4] sm:$0xf]
    %v657 = vld [vmem:[#allocation6 + $0x8] sm:$0xf]
    %v658 = vld [vmem:[#allocation6 + $0xc] sm:$0xf]
    %v659 = vld [vmem:[#allocation6 + $0x10] sm:$0xf]
    %v660 = vld [vmem:[#allocation6 + $0x14] sm:$0xf]
    %v661 = vld [vmem:[#allocation6 + $0x18] sm:$0xf]
    %v662 = vld [vmem:[#allocation6 + $0x1c] sm:$0xf]
    %v663 = vld [vmem:[#allocation6 + $0x20] sm:$0xf]
    %v664 = vld [vmem:[#allocation6 + $0x24] sm:$0xf]
    %v665 = vld [vmem:[#allocation6 + $0x28] sm:$0xf]
    %v666 = vld [vmem:[#allocation6 + $0x2c] sm:$0xf]
    %v667 = vld [vmem:[#allocation6 + $0x30] sm:$0xf]
    %v668 = vld [vmem:[#allocation6 + $0x34] sm:$0xf]
    %v669 = vld [vmem:[#allocation6 + $0x38] sm:$0xf]
    %v670 = vld [vmem:[#allocation6 + $0x3c] sm:$0xf]
    %v671 = vld [vmem:[%s7] sm:$0x1]
    %v672 = vpack.c.bf16 %v650, %v650
    %v674 = vlaneseq
    %v675 = vshrl.u32 %v674, 7
    %v676 = vsub.s32 0, %v675
    %v677 = vrot.slane %v671, %v676
    %v695 = vunpack.c.l.b16 %v655
    %v696 = vunpack.c.l.b16 %v656
    %v697 = vunpack.c.l.b16 %v657
    %v698 = vunpack.c.l.b16 %v658
    %v699 = vunpack.c.l.b16 %v659
    %v700 = vunpack.c.l.b16 %v660
    %v701 = vunpack.c.l.b16 %v661
    %v702 = vunpack.c.l.b16 %v662
    %v703 = vunpack.c.l.b16 %v663
    %v704 = vunpack.c.l.b16 %v664
    %v705 = vunpack.c.l.b16 %v665
    %v706 = vunpack.c.l.b16 %v666
    %v707 = vunpack.c.l.b16 %v667
    %v708 = vunpack.c.l.b16 %v668
    %v709 = vunpack.c.l.b16 %v669
    %v710 = vunpack.c.l.b16 %v670
    %v711 = vpack.c.b16 %v696, %v695
    %v712 = vpack.c.b16 %v698, %v697
    %v713 = vpack.c.b16 %v700, %v699
    %v714 = vpack.c.b16 %v702, %v701
    %v715 = vpack.c.b16 %v704, %v703
    %v716 = vpack.c.b16 %v706, %v705
    %v717 = vpack.c.b16 %v708, %v707
    %v718 = vpack.c.b16 %v710, %v709
    %727 = vmatprep.subr.bf16.mxu0 0
    %728 = vmatpush1.bf16.msra.mxu0 %v711
    %729 = vmatprep.subr.bf16.mxu0 0
    %730 = vmatpush1.bf16.msra.mxu0 %v712
    %731 = vmatprep.subr.bf16.mxu0 0
    %732 = vmatpush1.bf16.msra.mxu0 %v713
    %733 = vmatprep.subr.bf16.mxu0 0
    %734 = vmatpush1.bf16.msra.mxu0 %v714
    %735 = vmatprep.subr.bf16.mxu0 0
    %736 = vmatpush1.bf16.msra.mxu0 %v715
    %737 = vmatprep.subr.bf16.mxu0 0
    %738 = vmatpush1.bf16.msra.mxu0 %v716
    %739 = vmatprep.subr.bf16.mxu0 0
    %740 = vmatpush1.bf16.msra.mxu0 %v717
    %741 = vmatprep.subr.bf16.mxu0 0
    %742 = vmatpush1.bf16.msra.mxu0 %v718
    %743 = vmatprep.subr.bf16.mxu0 0
    %744 = vmatpush1.bf16.msra.mxu0 0
    %745 = vmatprep.subr.bf16.mxu0 0
    %746 = vmatpush1.bf16.msra.mxu0 0
    %747 = vmatprep.subr.bf16.mxu0 0
    %748 = vmatpush1.bf16.msra.mxu0 0
    %749 = vmatprep.subr.bf16.mxu0 0
    %750 = vmatpush1.bf16.msra.mxu0 0
    %751 = vmatprep.subr.bf16.mxu0 0
    %752 = vmatpush1.bf16.msra.mxu0 0
    %753 = vmatprep.subr.bf16.mxu0 0
    %754 = vmatpush1.bf16.msra.mxu0 0
    %755 = vmatprep.subr.bf16.mxu0 0
    %756 = vmatpush1.bf16.msra.mxu0 0
    %757 = vmatprep.subr.bf16.mxu0 0
    %758 = vmatpush1.bf16.msra.mxu0 0
    %759 = vmatprep.mubr.bf16.mxu0 0
    %760 = vmatmul.mubr.bf16.gmra.mrb[0].mxu0 %v672
    %v761 = vpop.f32.mrb[0].mxu0
    %v762 = vadd.f32 %v677, %v761
    %v763 = vpop.f32.mrb[0].mxu0
    %v764 = vpop.f32.mrb[0].mxu0
    %v765 = vpop.f32.mrb[0].mxu0
    %766 = vdwg.mxu0
    %v767 = vmul.f32 %v762, 0.5
    %v768 = vmul.f32 %v762, 0.044715
    %v769 = vmul.f32 %v768, %v762
    %v770 = vmul.f32 %v769, %v762
    %v771 = vadd.f32 %v762, %v770
    %v772 = vmul.f32 %v771, 0.7978846
    %v773 = vtanh.pop %v772
    %v774 = vadd.f32 %v773, 1.0
    %v775 = vmul.f32 %v767, %v774
    %s776 = scalar_lea.vmem [#allocation6], 64
    %v777 = vld [vmem:[%s776] sm:$0xf]
    %v778 = vld [vmem:[%s776 + $0x4] sm:$0xf]
    %v779 = vld [vmem:[%s776 + $0x8] sm:$0xf]
    %v780 = vld [vmem:[%s776 + $0xc] sm:$0xf]
    %v781 = vld [vmem:[%s776 + $0x10] sm:$0xf]
    %v782 = vld [vmem:[%s776 + $0x14] sm:$0xf]
    %v783 = vld [vmem:[%s776 + $0x18] sm:$0xf]
    %v784 = vld [vmem:[%s776 + $0x1c] sm:$0xf]
    %v785 = vld [vmem:[%s776 + $0x20] sm:$0xf]
    %v786 = vld [vmem:[%s776 + $0x24] sm:$0xf]
    %v787 = vld [vmem:[%s776 + $0x28] sm:$0xf]
    %v788 = vld [vmem:[%s776 + $0x2c] sm:$0xf]
    %v789 = vld [vmem:[%s776 + $0x30] sm:$0xf]
    %v790 = vld [vmem:[%s776 + $0x34] sm:$0xf]
    %v791 = vld [vmem:[%s776 + $0x38] sm:$0xf]
    %v792 = vld [vmem:[%s776 + $0x3c] sm:$0xf]
    %s793 = scalar_lea.vmem %s7, 1
    %v794 = vld [vmem:[%s793] sm:$0x1]
    %v795 = vpack.c.bf16 %v775, %v775
    %v797 = vlaneseq
    %v798 = vshrl.u32 %v797, 7
    %v799 = vsub.s32 0, %v798
    %v800 = vrot.slane %v794, %v799
    %v818 = vunpack.c.l.b16 %v777
    %v819 = vunpack.c.l.b16 %v778
    %v820 = vunpack.c.l.b16 %v779
    %v821 = vunpack.c.l.b16 %v780
    %v822 = vunpack.c.l.b16 %v781
    %v823 = vunpack.c.l.b16 %v782
    %v824 = vunpack.c.l.b16 %v783
    %v825 = vunpack.c.l.b16 %v784
    %v826 = vunpack.c.l.b16 %v785
    %v827 = vunpack.c.l.b16 %v786
    %v828 = vunpack.c.l.b16 %v787
    %v829 = vunpack.c.l.b16 %v788
    %v830 = vunpack.c.l.b16 %v789
    %v831 = vunpack.c.l.b16 %v790
    %v832 = vunpack.c.l.b16 %v791
    %v833 = vunpack.c.l.b16 %v792
    %v834 = vpack.c.b16 %v819, %v818
    %v835 = vpack.c.b16 %v821, %v820
    %v836 = vpack.c.b16 %v823, %v822
    %v837 = vpack.c.b16 %v825, %v824
    %v838 = vpack.c.b16 %v827, %v826
    %v839 = vpack.c.b16 %v829, %v828
    %v840 = vpack.c.b16 %v831, %v830
    %v841 = vpack.c.b16 %v833, %v832
    %850 = vmatprep.subr.bf16.mxu0 0
    %851 = vmatpush1.bf16.msra.mxu0 %v834
    %852 = vmatprep.subr.bf16.mxu0 0
    %853 = vmatpush1.bf16.msra.mxu0 %v835
    %854 = vmatprep.subr.bf16.mxu0 0
    %855 = vmatpush1.bf16.msra.mxu0 %v836
    %856 = vmatprep.subr.bf16.mxu0 0
    %857 = vmatpush1.bf16.msra.mxu0 %v837
    %858 = vmatprep.subr.bf16.mxu0 0
    %859 = vmatpush1.bf16.msra.mxu0 %v838
    %860 = vmatprep.subr.bf16.mxu0 0
    %861 = vmatpush1.bf16.msra.mxu0 %v839
    %862 = vmatprep.subr.bf16.mxu0 0
    %863 = vmatpush1.bf16.msra.mxu0 %v840
    %864 = vmatprep.subr.bf16.mxu0 0
    %865 = vmatpush1.bf16.msra.mxu0 %v841
    %866 = vmatprep.subr.bf16.mxu0 0
    %867 = vmatpush1.bf16.msra.mxu0 0
    %868 = vmatprep.subr.bf16.mxu0 0
    %869 = vmatpush1.bf16.msra.mxu0 0
    %870 = vmatprep.subr.bf16.mxu0 0
    %871 = vmatpush1.bf16.msra.mxu0 0
    %872 = vmatprep.subr.bf16.mxu0 0
    %873 = vmatpush1.bf16.msra.mxu0 0
    %874 = vmatprep.subr.bf16.mxu0 0
    %875 = vmatpush1.bf16.msra.mxu0 0
    %876 = vmatprep.subr.bf16.mxu0 0
    %877 = vmatpush1.bf16.msra.mxu0 0
    %878 = vmatprep.subr.bf16.mxu0 0
    %879 = vmatpush1.bf16.msra.mxu0 0
    %880 = vmatprep.subr.bf16.mxu0 0
    %881 = vmatpush1.bf16.msra.mxu0 0
    %882 = vmatprep.mubr.bf16.mxu0 0
    %883 = vmatmul.mubr.bf16.gmra.mrb[0].mxu0 %v795
    %v884 = vpop.f32.mrb[0].mxu0
    %v885 = vadd.f32 %v800, %v884
    %v886 = vpop.f32.mrb[0].mxu0
    %v887 = vpop.f32.mrb[0].mxu0
    %v888 = vpop.f32.mrb[0].mxu0
    %889 = vdwg.mxu0
    %v890 = vmul.f32 %v885, 0.5
    %v891 = vmul.f32 %v885, 0.044715
    %v892 = vmul.f32 %v891, %v885
    %v893 = vmul.f32 %v892, %v885
    %v894 = vadd.f32 %v885, %v893
    %v895 = vmul.f32 %v894, 0.7978846
    %v896 = vtanh.pop %v895
    %v897 = vadd.f32 %v896, 1.0
    %v898 = vmul.f32 %v890, %v897
    %s899 = scalar_lea.vmem [#allocation6], 128
    %v900 = vld [vmem:[%s899] sm:$0xf]
    %v901 = vld [vmem:[%s899 + $0x4] sm:$0xf]
    %v902 = vld [vmem:[%s899 + $0x8] sm:$0xf]
    %v903 = vld [vmem:[%s899 + $0xc] sm:$0xf]
    %v904 = vld [vmem:[%s899 + $0x10] sm:$0xf]
    %v905 = vld [vmem:[%s899 + $0x14] sm:$0xf]
    %v906 = vld [vmem:[%s899 + $0x18] sm:$0xf]
    %v907 = vld [vmem:[%s899 + $0x1c] sm:$0xf]
    %v908 = vld [vmem:[%s899 + $0x20] sm:$0xf]
    %v909 = vld [vmem:[%s899 + $0x24] sm:$0xf]
    %v910 = vld [vmem:[%s899 + $0x28] sm:$0xf]
    %v911 = vld [vmem:[%s899 + $0x2c] sm:$0xf]
    %v912 = vld [vmem:[%s899 + $0x30] sm:$0xf]
    %v913 = vld [vmem:[%s899 + $0x34] sm:$0xf]
    %v914 = vld [vmem:[%s899 + $0x38] sm:$0xf]
    %v915 = vld [vmem:[%s899 + $0x3c] sm:$0xf]
    %s916 = scalar_lea.vmem %s7, 2
    %v917 = vld [vmem:[%s916] sm:$0x1]
    %v918 = vpack.c.bf16 %v898, %v898
    %v920 = vlaneseq
    %v921 = vshrl.u32 %v920, 7
    %v922 = vsub.s32 0, %v921
    %v923 = vrot.slane %v917, %v922
    %v941 = vunpack.c.l.b16 %v900
    %v942 = vunpack.c.l.b16 %v901
    %v943 = vunpack.c.l.b16 %v902
    %v944 = vunpack.c.l.b16 %v903
    %v945 = vunpack.c.l.b16 %v904
    %v946 = vunpack.c.l.b16 %v905
    %v947 = vunpack.c.l.b16 %v906
    %v948 = vunpack.c.l.b16 %v907
    %v949 = vunpack.c.l.b16 %v908
    %v950 = vunpack.c.l.b16 %v909
    %v951 = vunpack.c.l.b16 %v910
    %v952 = vunpack.c.l.b16 %v911
    %v953 = vunpack.c.l.b16 %v912
    %v954 = vunpack.c.l.b16 %v913
    %v955 = vunpack.c.l.b16 %v914
    %v956 = vunpack.c.l.b16 %v915
    %v957 = vpack.c.b16 %v942, %v941
    %v958 = vpack.c.b16 %v944, %v943
    %v959 = vpack.c.b16 %v946, %v945
    %v960 = vpack.c.b16 %v948, %v947
    %v961 = vpack.c.b16 %v950, %v949
    %v962 = vpack.c.b16 %v952, %v951
    %v963 = vpack.c.b16 %v954, %v953
    %v964 = vpack.c.b16 %v956, %v955
    %973 = vmatprep.subr.bf16.mxu0 0
    %974 = vmatpush1.bf16.msra.mxu0 %v957
    %975 = vmatprep.subr.bf16.mxu0 0
    %976 = vmatpush1.bf16.msra.mxu0 %v958
    %977 = vmatprep.subr.bf16.mxu0 0
    %978 = vmatpush1.bf16.msra.mxu0 %v959
    %979 = vmatprep.subr.bf16.mxu0 0
    %980 = vmatpush1.bf16.msra.mxu0 %v960
    %981 = vmatprep.subr.bf16.mxu0 0
    %982 = vmatpush1.bf16.msra.mxu0 %v961
    %983 = vmatprep.subr.bf16.mxu0 0
    %984 = vmatpush1.bf16.msra.mxu0 %v962
    %985 = vmatprep.subr.bf16.mxu0 0
    %986 = vmatpush1.bf16.msra.mxu0 %v963
    %987 = vmatprep.subr.bf16.mxu0 0
    %988 = vmatpush1.bf16.msra.mxu0 %v964
    %989 = vmatprep.subr.bf16.mxu0 0
    %990 = vmatpush1.bf16.msra.mxu0 0
    %991 = vmatprep.subr.bf16.mxu0 0
    %992 = vmatpush1.bf16.msra.mxu0 0
    %993 = vmatprep.subr.bf16.mxu0 0
    %994 = vmatpush1.bf16.msra.mxu0 0
    %995 = vmatprep.subr.bf16.mxu0 0
    %996 = vmatpush1.bf16.msra.mxu0 0
    %997 = vmatprep.subr.bf16.mxu0 0
    %998 = vmatpush1.bf16.msra.mxu0 0
    %999 = vmatprep.subr.bf16.mxu0 0
    %1000 = vmatpush1.bf16.msra.mxu0 0
    %1001 = vmatprep.subr.bf16.mxu0 0
    %1002 = vmatpush1.bf16.msra.mxu0 0
    %1003 = vmatprep.subr.bf16.mxu0 0
    %1004 = vmatpush1.bf16.msra.mxu0 0
    %1005 = vmatprep.mubr.bf16.mxu0 0
    %1006 = vmatmul.mubr.bf16.gmra.mrb[0].mxu0 %v918
    %v1007 = vpop.f32.mrb[0].mxu0
    %v1008 = vadd.f32 %v923, %v1007
    %v1009 = vpop.f32.mrb[0].mxu0
    %v1010 = vpop.f32.mrb[0].mxu0
    %v1011 = vpop.f32.mrb[0].mxu0
    %1012 = vdwg.mxu0
    %v1013 = vmul.f32 %v1008, 0.5
    %v1014 = vmul.f32 %v1008, 0.044715
    %v1015 = vmul.f32 %v1014, %v1008
    %v1016 = vmul.f32 %v1015, %v1008
    %v1017 = vadd.f32 %v1008, %v1016
    %v1018 = vmul.f32 %v1017, 0.7978846
    %v1019 = vtanh.pop %v1018
    %v1020 = vadd.f32 %v1019, 1.0
    %v1021 = vmul.f32 %v1013, %v1020
    %v1022 = vld [vmem:[#allocation9] sm:$0xff]
    %v1023 = vld [vmem:[#allocation9 + $0x8] sm:$0xff]
    %v1024 = vld [vmem:[#allocation9 + $0x10] sm:$0xff]
    %v1025 = vld [vmem:[#allocation9 + $0x18] sm:$0xff]
    %v1026 = vld [vmem:[#allocation9 + $0x20] sm:$0xff]
    %v1027 = vld [vmem:[#allocation9 + $0x28] sm:$0xff]
    %v1028 = vld [vmem:[#allocation9 + $0x30] sm:$0xff]
    %v1029 = vld [vmem:[#allocation9 + $0x38] sm:$0xff]
    %v1030 = vld [vmem:[#allocation9 + $0x40] sm:$0xff]
    %v1031 = vld [vmem:[#allocation9 + $0x48] sm:$0xff]
    %v1032 = vld [vmem:[#allocation9 + $0x50] sm:$0xff]
    %v1033 = vld [vmem:[#allocation9 + $0x58] sm:$0xff]
    %v1034 = vld [vmem:[#allocation9 + $0x60] sm:$0xff]
    %v1035 = vld [vmem:[#allocation9 + $0x68] sm:$0xff]
    %v1036 = vld [vmem:[#allocation9 + $0x70] sm:$0xff]
    %v1037 = vld [vmem:[#allocation9 + $0x78] sm:$0xff]
    %v1038 = vld [vmem:[%s9] sm:$0x3]
    %v1039 = vpack.c.bf16 %v1021, %v1021
    %v1041 = vlaneseq
    %v1042 = vshrl.u32 %v1041, 7
    %v1043 = vsub.s32 0, %v1042
    %v1044 = vrot.slane %v1038, %v1043
    %v1045 = vlaneseq
    %v1046 = vshrl.u32 %v1045, 7
    %v1047 = vsub.s32 1, %v1046
    %v1048 = vrot.slane %v1038, %v1047
    %v1067 = vunpack.c.l.b16 %v1022
    %v1068 = vunpack.c.h.b16 %v1022
    %v1069 = vunpack.c.l.b16 %v1023
    %v1070 = vunpack.c.h.b16 %v1023
    %v1071 = vunpack.c.l.b16 %v1024
    %v1072 = vunpack.c.h.b16 %v1024
    %v1073 = vunpack.c.l.b16 %v1025
    %v1074 = vunpack.c.h.b16 %v1025
    %v1075 = vunpack.c.l.b16 %v1026
    %v1076 = vunpack.c.h.b16 %v1026
    %v1077 = vunpack.c.l.b16 %v1027
    %v1078 = vunpack.c.h.b16 %v1027
    %v1079 = vunpack.c.l.b16 %v1028
    %v1080 = vunpack.c.h.b16 %v1028
    %v1081 = vunpack.c.l.b16 %v1029
    %v1082 = vunpack.c.h.b16 %v1029
    %v1083 = vunpack.c.l.b16 %v1030
    %v1084 = vunpack.c.h.b16 %v1030
    %v1085 = vunpack.c.l.b16 %v1031
    %v1086 = vunpack.c.h.b16 %v1031
    %v1087 = vunpack.c.l.b16 %v1032
    %v1088 = vunpack.c.h.b16 %v1032
    %v1089 = vunpack.c.l.b16 %v1033
    %v1090 = vunpack.c.h.b16 %v1033
    %v1091 = vunpack.c.l.b16 %v1034
    %v1092 = vunpack.c.h.b16 %v1034
    %v1093 = vunpack.c.l.b16 %v1035
    %v1094 = vunpack.c.h.b16 %v1035
    %v1095 = vunpack.c.l.b16 %v1036
    %v1096 = vunpack.c.h.b16 %v1036
    %v1097 = vunpack.c.l.b16 %v1037
    %v1098 = vunpack.c.h.b16 %v1037
    %v1099 = vpack.c.b16 %v1069, %v1067
    %v1100 = vpack.c.b16 %v1070, %v1068
    %v1101 = vpack.c.b16 %v1073, %v1071
    %v1102 = vpack.c.b16 %v1074, %v1072
    %v1103 = vpack.c.b16 %v1077, %v1075
    %v1104 = vpack.c.b16 %v1078, %v1076
    %v1105 = vpack.c.b16 %v1081, %v1079
    %v1106 = vpack.c.b16 %v1082, %v1080
    %v1107 = vpack.c.b16 %v1085, %v1083
    %v1108 = vpack.c.b16 %v1086, %v1084
    %v1109 = vpack.c.b16 %v1089, %v1087
    %v1110 = vpack.c.b16 %v1090, %v1088
    %v1111 = vpack.c.b16 %v1093, %v1091
    %v1112 = vpack.c.b16 %v1094, %v1092
    %v1113 = vpack.c.b16 %v1097, %v1095
    %v1114 = vpack.c.b16 %v1098, %v1096
    %1131 = vmatprep.subr.bf16.mxu0 %v1100
    %1132 = vmatpush1.bf16.msra.mxu0 %v1099
    %1133 = vmatprep.subr.bf16.mxu0 %v1102
    %1134 = vmatpush1.bf16.msra.mxu0 %v1101
    %1135 = vmatprep.subr.bf16.mxu0 %v1104
    %1136 = vmatpush1.bf16.msra.mxu0 %v1103
    %1137 = vmatprep.subr.bf16.mxu0 %v1106
    %1138 = vmatpush1.bf16.msra.mxu0 %v1105
    %1139 = vmatprep.subr.bf16.mxu0 %v1108
    %1140 = vmatpush1.bf16.msra.mxu0 %v1107
    %1141 = vmatprep.subr.bf16.mxu0 %v1110
    %1142 = vmatpush1.bf16.msra.mxu0 %v1109
    %1143 = vmatprep.subr.bf16.mxu0 %v1112
    %1144 = vmatpush1.bf16.msra.mxu0 %v1111
    %1145 = vmatprep.subr.bf16.mxu0 %v1114
    %1146 = vmatpush1.bf16.msra.mxu0 %v1113
    %1147 = vmatprep.subr.bf16.mxu0 0
    %1148 = vmatpush1.bf16.msra.mxu0 0
    %1149 = vmatprep.subr.bf16.mxu0 0
    %1150 = vmatpush1.bf16.msra.mxu0 0
    %1151 = vmatprep.subr.bf16.mxu0 0
    %1152 = vmatpush1.bf16.msra.mxu0 0
    %1153 = vmatprep.subr.bf16.mxu0 0
    %1154 = vmatpush1.bf16.msra.mxu0 0
    %1155 = vmatprep.subr.bf16.mxu0 0
    %1156 = vmatpush1.bf16.msra.mxu0 0
    %1157 = vmatprep.subr.bf16.mxu0 0
    %1158 = vmatpush1.bf16.msra.mxu0 0
    %1159 = vmatprep.subr.bf16.mxu0 0
    %1160 = vmatpush1.bf16.msra.mxu0 0
    %1161 = vmatprep.subr.bf16.mxu0 0
    %1162 = vmatpush1.bf16.msra.mxu0 0
    %1163 = vmatprep.mubr.bf16.mxu0 0
    %1164 = vmatmul.mubr.bf16.gmra.mrb[0].mxu0 %v1039
    %v1165 = vpop.f32.mrb[0].mxu0
    %v1166 = vadd.f32 %v1044, %v1165
    %v1167 = vpop.f32.mrb[0].mxu0
    %v1168 = vadd.f32 %v1048, %v1167
    %v1169 = vpop.f32.mrb[0].mxu0
    %v1170 = vpop.f32.mrb[0].mxu0
    %1171 = vdwg.mxu0
    %v1172 = vld [vmem:[#allocation7] sm:$0xf]
    %v1173 = vld [vmem:[#allocation7 + $0x4] sm:$0xf]
    %v1174 = vld [vmem:[#allocation7 + $0x8] sm:$0xf]
    %v1175 = vld [vmem:[#allocation7 + $0xc] sm:$0xf]
    %v1176 = vld [vmem:[#allocation7 + $0x10] sm:$0xf]
    %v1177 = vld [vmem:[#allocation7 + $0x14] sm:$0xf]
    %v1178 = vld [vmem:[#allocation7 + $0x18] sm:$0xf]
    %v1179 = vld [vmem:[#allocation7 + $0x1c] sm:$0xf]
    %v1180 = vld [vmem:[#allocation7 + $0x20] sm:$0xf]
    %v1181 = vld [vmem:[#allocation7 + $0x24] sm:$0xf]
    %v1182 = vld [vmem:[#allocation7 + $0x28] sm:$0xf]
    %v1183 = vld [vmem:[#allocation7 + $0x2c] sm:$0xf]
    %v1184 = vld [vmem:[#allocation7 + $0x30] sm:$0xf]
    %v1185 = vld [vmem:[#allocation7 + $0x34] sm:$0xf]
    %v1186 = vld [vmem:[#allocation7 + $0x38] sm:$0xf]
    %v1187 = vld [vmem:[#allocation7 + $0x3c] sm:$0xf]
    %v1188 = vld [vmem:[%s8] sm:$0x1]
    %v1190 = vlaneseq
    %v1191 = vshrl.u32 %v1190, 7
    %v1192 = vsub.s32 0, %v1191
    %v1193 = vrot.slane %v1188, %v1192
    %v1211 = vunpack.c.l.b16 %v1172
    %v1212 = vunpack.c.l.b16 %v1173
    %v1213 = vunpack.c.l.b16 %v1174
    %v1214 = vunpack.c.l.b16 %v1175
    %v1215 = vunpack.c.l.b16 %v1176
    %v1216 = vunpack.c.l.b16 %v1177
    %v1217 = vunpack.c.l.b16 %v1178
    %v1218 = vunpack.c.l.b16 %v1179
    %v1219 = vunpack.c.l.b16 %v1180
    %v1220 = vunpack.c.l.b16 %v1181
    %v1221 = vunpack.c.l.b16 %v1182
    %v1222 = vunpack.c.l.b16 %v1183
    %v1223 = vunpack.c.l.b16 %v1184
    %v1224 = vunpack.c.l.b16 %v1185
    %v1225 = vunpack.c.l.b16 %v1186
    %v1226 = vunpack.c.l.b16 %v1187
    %v1227 = vpack.c.b16 %v1212, %v1211
    %v1228 = vpack.c.b16 %v1214, %v1213
    %v1229 = vpack.c.b16 %v1216, %v1215
    %v1230 = vpack.c.b16 %v1218, %v1217
    %v1231 = vpack.c.b16 %v1220, %v1219
    %v1232 = vpack.c.b16 %v1222, %v1221
    %v1233 = vpack.c.b16 %v1224, %v1223
    %v1234 = vpack.c.b16 %v1226, %v1225
    %1243 = vmatprep.subr.bf16.mxu0 0
    %1244 = vmatpush1.bf16.msra.mxu0 %v1227
    %1245 = vmatprep.subr.bf16.mxu0 0
    %1246 = vmatpush1.bf16.msra.mxu0 %v1228
    %1247 = vmatprep.subr.bf16.mxu0 0
    %1248 = vmatpush1.bf16.msra.mxu0 %v1229
    %1249 = vmatprep.subr.bf16.mxu0 0
    %1250 = vmatpush1.bf16.msra.mxu0 %v1230
    %1251 = vmatprep.subr.bf16.mxu0 0
    %1252 = vmatpush1.bf16.msra.mxu0 %v1231
    %1253 = vmatprep.subr.bf16.mxu0 0
    %1254 = vmatpush1.bf16.msra.mxu0 %v1232
    %1255 = vmatprep.subr.bf16.mxu0 0
    %1256 = vmatpush1.bf16.msra.mxu0 %v1233
    %1257 = vmatprep.subr.bf16.mxu0 0
    %1258 = vmatpush1.bf16.msra.mxu0 %v1234
    %1259 = vmatprep.subr.bf16.mxu0 0
    %1260 = vmatpush1.bf16.msra.mxu0 0
    %1261 = vmatprep.subr.bf16.mxu0 0
    %1262 = vmatpush1.bf16.msra.mxu0 0
    %1263 = vmatprep.subr.bf16.mxu0 0
    %1264 = vmatpush1.bf16.msra.mxu0 0
    %1265 = vmatprep.subr.bf16.mxu0 0
    %1266 = vmatpush1.bf16.msra.mxu0 0
    %1267 = vmatprep.subr.bf16.mxu0 0
    %1268 = vmatpush1.bf16.msra.mxu0 0
    %1269 = vmatprep.subr.bf16.mxu0 0
    %1270 = vmatpush1.bf16.msra.mxu0 0
    %1271 = vmatprep.subr.bf16.mxu0 0
    %1272 = vmatpush1.bf16.msra.mxu0 0
    %1273 = vmatprep.subr.bf16.mxu0 0
    %1274 = vmatpush1.bf16.msra.mxu0 0
    %1275 = vmatprep.mubr.bf16.mxu0 0
    %1276 = vmatmul.mubr.bf16.gmra.mrb[0].mxu0 %v672
    %v1277 = vpop.f32.mrb[0].mxu0
    %v1278 = vadd.f32 %v1193, %v1277
    %v1279 = vpop.f32.mrb[0].mxu0
    %v1280 = vpop.f32.mrb[0].mxu0
    %v1281 = vpop.f32.mrb[0].mxu0
    %1282 = vdwg.mxu0
    %v1283 = vmul.f32 %v1278, 0.5
    %v1284 = vmul.f32 %v1278, 0.044715
    %v1285 = vmul.f32 %v1284, %v1278
    %v1286 = vmul.f32 %v1285, %v1278
    %v1287 = vadd.f32 %v1278, %v1286
    %v1288 = vmul.f32 %v1287, 0.7978846
    %v1289 = vtanh.pop %v1288
    %v1290 = vadd.f32 %v1289, 1.0
    %v1291 = vmul.f32 %v1283, %v1290
    %s1292 = scalar_lea.vmem [#allocation7], 64
    %v1293 = vld [vmem:[%s1292] sm:$0xf]
    %v1294 = vld [vmem:[%s1292 + $0x4] sm:$0xf]
    %v1295 = vld [vmem:[%s1292 + $0x8] sm:$0xf]
    %v1296 = vld [vmem:[%s1292 + $0xc] sm:$0xf]
    %v1297 = vld [vmem:[%s1292 + $0x10] sm:$0xf]
    %v1298 = vld [vmem:[%s1292 + $0x14] sm:$0xf]
    %v1299 = vld [vmem:[%s1292 + $0x18] sm:$0xf]
    %v1300 = vld [vmem:[%s1292 + $0x1c] sm:$0xf]
    %v1301 = vld [vmem:[%s1292 + $0x20] sm:$0xf]
    %v1302 = vld [vmem:[%s1292 + $0x24] sm:$0xf]
    %v1303 = vld [vmem:[%s1292 + $0x28] sm:$0xf]
    %v1304 = vld [vmem:[%s1292 + $0x2c] sm:$0xf]
    %v1305 = vld [vmem:[%s1292 + $0x30] sm:$0xf]
    %v1306 = vld [vmem:[%s1292 + $0x34] sm:$0xf]
    %v1307 = vld [vmem:[%s1292 + $0x38] sm:$0xf]
    %v1308 = vld [vmem:[%s1292 + $0x3c] sm:$0xf]
    %s1309 = scalar_lea.vmem %s8, 1
    %v1310 = vld [vmem:[%s1309] sm:$0x1]
    %v1311 = vpack.c.bf16 %v1291, %v1291
    %v1313 = vlaneseq
    %v1314 = vshrl.u32 %v1313, 7
    %v1315 = vsub.s32 0, %v1314
    %v1316 = vrot.slane %v1310, %v1315
    %v1334 = vunpack.c.l.b16 %v1293
    %v1335 = vunpack.c.l.b16 %v1294
    %v1336 = vunpack.c.l.b16 %v1295
    %v1337 = vunpack.c.l.b16 %v1296
    %v1338 = vunpack.c.l.b16 %v1297
    %v1339 = vunpack.c.l.b16 %v1298
    %v1340 = vunpack.c.l.b16 %v1299
    %v1341 = vunpack.c.l.b16 %v1300
    %v1342 = vunpack.c.l.b16 %v1301
    %v1343 = vunpack.c.l.b16 %v1302
    %v1344 = vunpack.c.l.b16 %v1303
    %v1345 = vunpack.c.l.b16 %v1304
    %v1346 = vunpack.c.l.b16 %v1305
    %v1347 = vunpack.c.l.b16 %v1306
    %v1348 = vunpack.c.l.b16 %v1307
    %v1349 = vunpack.c.l.b16 %v1308
    %v1350 = vpack.c.b16 %v1335, %v1334
    %v1351 = vpack.c.b16 %v1337, %v1336
    %v1352 = vpack.c.b16 %v1339, %v1338
    %v1353 = vpack.c.b16 %v1341, %v1340
    %v1354 = vpack.c.b16 %v1343, %v1342
    %v1355 = vpack.c.b16 %v1345, %v1344
    %v1356 = vpack.c.b16 %v1347, %v1346
    %v1357 = vpack.c.b16 %v1349, %v1348
    %1366 = vmatprep.subr.bf16.mxu0 0
    %1367 = vmatpush1.bf16.msra.mxu0 %v1350
    %1368 = vmatprep.subr.bf16.mxu0 0
    %1369 = vmatpush1.bf16.msra.mxu0 %v1351
    %1370 = vmatprep.subr.bf16.mxu0 0
    %1371 = vmatpush1.bf16.msra.mxu0 %v1352
    %1372 = vmatprep.subr.bf16.mxu0 0
    %1373 = vmatpush1.bf16.msra.mxu0 %v1353
    %1374 = vmatprep.subr.bf16.mxu0 0
    %1375 = vmatpush1.bf16.msra.mxu0 %v1354
    %1376 = vmatprep.subr.bf16.mxu0 0
    %1377 = vmatpush1.bf16.msra.mxu0 %v1355
    %1378 = vmatprep.subr.bf16.mxu0 0
    %1379 = vmatpush1.bf16.msra.mxu0 %v1356
    %1380 = vmatprep.subr.bf16.mxu0 0
    %1381 = vmatpush1.bf16.msra.mxu0 %v1357
    %1382 = vmatprep.subr.bf16.mxu0 0
    %1383 = vmatpush1.bf16.msra.mxu0 0
    %1384 = vmatprep.subr.bf16.mxu0 0
    %1385 = vmatpush1.bf16.msra.mxu0 0
    %1386 = vmatprep.subr.bf16.mxu0 0
    %1387 = vmatpush1.bf16.msra.mxu0 0
    %1388 = vmatprep.subr.bf16.mxu0 0
    %1389 = vmatpush1.bf16.msra.mxu0 0
    %1390 = vmatprep.subr.bf16.mxu0 0
    %1391 = vmatpush1.bf16.msra.mxu0 0
    %1392 = vmatprep.subr.bf16.mxu0 0
    %1393 = vmatpush1.bf16.msra.mxu0 0
    %1394 = vmatprep.subr.bf16.mxu0 0
    %1395 = vmatpush1.bf16.msra.mxu0 0
    %1396 = vmatprep.subr.bf16.mxu0 0
    %1397 = vmatpush1.bf16.msra.mxu0 0
    %1398 = vmatprep.mubr.bf16.mxu0 0
    %1399 = vmatmul.mubr.bf16.gmra.mrb[0].mxu0 %v1311
    %v1400 = vpop.f32.mrb[0].mxu0
    %v1401 = vadd.f32 %v1316, %v1400
    %v1402 = vpop.f32.mrb[0].mxu0
    %v1403 = vpop.f32.mrb[0].mxu0
    %v1404 = vpop.f32.mrb[0].mxu0
    %1405 = vdwg.mxu0
    %v1406 = vmul.f32 %v1401, 0.5
    %v1407 = vmul.f32 %v1401, 0.044715
    %v1408 = vmul.f32 %v1407, %v1401
    %v1409 = vmul.f32 %v1408, %v1401
    %v1410 = vadd.f32 %v1401, %v1409
    %v1411 = vmul.f32 %v1410, 0.7978846
    %v1412 = vtanh.pop %v1411
    %v1413 = vadd.f32 %v1412, 1.0
    %v1414 = vmul.f32 %v1406, %v1413
    %s1415 = scalar_lea.vmem [#allocation7], 128
    %v1416 = vld [vmem:[%s1415] sm:$0xf]
    %v1417 = vld [vmem:[%s1415 + $0x4] sm:$0xf]
    %v1418 = vld [vmem:[%s1415 + $0x8] sm:$0xf]
    %v1419 = vld [vmem:[%s1415 + $0xc] sm:$0xf]
    %v1420 = vld [vmem:[%s1415 + $0x10] sm:$0xf]
    %v1421 = vld [vmem:[%s1415 + $0x14] sm:$0xf]
    %v1422 = vld [vmem:[%s1415 + $0x18] sm:$0xf]
    %v1423 = vld [vmem:[%s1415 + $0x1c] sm:$0xf]
    %v1424 = vld [vmem:[%s1415 + $0x20] sm:$0xf]
    %v1425 = vld [vmem:[%s1415 + $0x24] sm:$0xf]
    %v1426 = vld [vmem:[%s1415 + $0x28] sm:$0xf]
    %v1427 = vld [vmem:[%s1415 + $0x2c] sm:$0xf]
    %v1428 = vld [vmem:[%s1415 + $0x30] sm:$0xf]
    %v1429 = vld [vmem:[%s1415 + $0x34] sm:$0xf]
    %v1430 = vld [vmem:[%s1415 + $0x38] sm:$0xf]
    %v1431 = vld [vmem:[%s1415 + $0x3c] sm:$0xf]
    %s1432 = scalar_lea.vmem %s8, 2
    %v1433 = vld [vmem:[%s1432] sm:$0x1]
    %v1434 = vpack.c.bf16 %v1414, %v1414
    %v1436 = vlaneseq
    %v1437 = vshrl.u32 %v1436, 7
    %v1438 = vsub.s32 0, %v1437
    %v1439 = vrot.slane %v1433, %v1438
    %v1457 = vunpack.c.l.b16 %v1416
    %v1458 = vunpack.c.l.b16 %v1417
    %v1459 = vunpack.c.l.b16 %v1418
    %v1460 = vunpack.c.l.b16 %v1419
    %v1461 = vunpack.c.l.b16 %v1420
    %v1462 = vunpack.c.l.b16 %v1421
    %v1463 = vunpack.c.l.b16 %v1422
    %v1464 = vunpack.c.l.b16 %v1423
    %v1465 = vunpack.c.l.b16 %v1424
    %v1466 = vunpack.c.l.b16 %v1425
    %v1467 = vunpack.c.l.b16 %v1426
    %v1468 = vunpack.c.l.b16 %v1427
    %v1469 = vunpack.c.l.b16 %v1428
    %v1470 = vunpack.c.l.b16 %v1429
    %v1471 = vunpack.c.l.b16 %v1430
    %v1472 = vunpack.c.l.b16 %v1431
    %v1473 = vpack.c.b16 %v1458, %v1457
    %v1474 = vpack.c.b16 %v1460, %v1459
    %v1475 = vpack.c.b16 %v1462, %v1461
    %v1476 = vpack.c.b16 %v1464, %v1463
    %v1477 = vpack.c.b16 %v1466, %v1465
    %v1478 = vpack.c.b16 %v1468, %v1467
    %v1479 = vpack.c.b16 %v1470, %v1469
    %v1480 = vpack.c.b16 %v1472, %v1471
    %1489 = vmatprep.subr.bf16.mxu0 0
    %1490 = vmatpush1.bf16.msra.mxu0 %v1473
    %1491 = vmatprep.subr.bf16.mxu0 0
    %1492 = vmatpush1.bf16.msra.mxu0 %v1474
    %1493 = vmatprep.subr.bf16.mxu0 0
    %1494 = vmatpush1.bf16.msra.mxu0 %v1475
    %1495 = vmatprep.subr.bf16.mxu0 0
    %1496 = vmatpush1.bf16.msra.mxu0 %v1476
    %1497 = vmatprep.subr.bf16.mxu0 0
    %1498 = vmatpush1.bf16.msra.mxu0 %v1477
    %1499 = vmatprep.subr.bf16.mxu0 0
    %1500 = vmatpush1.bf16.msra.mxu0 %v1478
    %1501 = vmatprep.subr.bf16.mxu0 0
    %1502 = vmatpush1.bf16.msra.mxu0 %v1479
    %1503 = vmatprep.subr.bf16.mxu0 0
    %1504 = vmatpush1.bf16.msra.mxu0 %v1480
    %1505 = vmatprep.subr.bf16.mxu0 0
    %1506 = vmatpush1.bf16.msra.mxu0 0
    %1507 = vmatprep.subr.bf16.mxu0 0
    %1508 = vmatpush1.bf16.msra.mxu0 0
    %1509 = vmatprep.subr.bf16.mxu0 0
    %1510 = vmatpush1.bf16.msra.mxu0 0
    %1511 = vmatprep.subr.bf16.mxu0 0
    %1512 = vmatpush1.bf16.msra.mxu0 0
    %1513 = vmatprep.subr.bf16.mxu0 0
    %1514 = vmatpush1.bf16.msra.mxu0 0
    %1515 = vmatprep.subr.bf16.mxu0 0
    %1516 = vmatpush1.bf16.msra.mxu0 0
    %1517 = vmatprep.subr.bf16.mxu0 0
    %1518 = vmatpush1.bf16.msra.mxu0 0
    %1519 = vmatprep.subr.bf16.mxu0 0
    %1520 = vmatpush1.bf16.msra.mxu0 0
    %1521 = vmatprep.mubr.bf16.mxu0 0
    %1522 = vmatmul.mubr.bf16.gmra.mrb[0].mxu0 %v1434
    %v1523 = vpop.f32.mrb[0].mxu0
    %v1524 = vadd.f32 %v1439, %v1523
    %v1525 = vpop.f32.mrb[0].mxu0
    %v1526 = vpop.f32.mrb[0].mxu0
    %v1527 = vpop.f32.mrb[0].mxu0
    %1528 = vdwg.mxu0
    %v1529 = vmul.f32 %v1524, 0.5
    %v1530 = vmul.f32 %v1524, 0.044715
    %v1531 = vmul.f32 %v1530, %v1524
    %v1532 = vmul.f32 %v1531, %v1524
    %v1533 = vadd.f32 %v1524, %v1532
    %v1534 = vmul.f32 %v1533, 0.7978846
    %v1535 = vtanh.pop %v1534
    %v1536 = vadd.f32 %v1535, 1.0
    %v1537 = vmul.f32 %v1529, %v1536
    %s1538 = scalar_lea.vmem [#allocation7], 192
    %v1539 = vld [vmem:[%s1538] sm:$0xf]
    %v1540 = vld [vmem:[%s1538 + $0x4] sm:$0xf]
    %v1541 = vld [vmem:[%s1538 + $0x8] sm:$0xf]
    %v1542 = vld [vmem:[%s1538 + $0xc] sm:$0xf]
    %v1543 = vld [vmem:[%s1538 + $0x10] sm:$0xf]
    %v1544 = vld [vmem:[%s1538 + $0x14] sm:$0xf]
    %v1545 = vld [vmem:[%s1538 + $0x18] sm:$0xf]
    %v1546 = vld [vmem:[%s1538 + $0x1c] sm:$0xf]
    %v1547 = vld [vmem:[%s1538 + $0x20] sm:$0xf]
    %v1548 = vld [vmem:[%s1538 + $0x24] sm:$0xf]
    %v1549 = vld [vmem:[%s1538 + $0x28] sm:$0xf]
    %v1550 = vld [vmem:[%s1538 + $0x2c] sm:$0xf]
    %v1551 = vld [vmem:[%s1538 + $0x30] sm:$0xf]
    %v1552 = vld [vmem:[%s1538 + $0x34] sm:$0xf]
    %v1553 = vld [vmem:[%s1538 + $0x38] sm:$0xf]
    %v1554 = vld [vmem:[%s1538 + $0x3c] sm:$0xf]
    %s1555 = scalar_lea.vmem %s8, 3
    %v1556 = vld [vmem:[%s1555] sm:$0x1]
    %v1557 = vpack.c.bf16 %v1537, %v1537
    %v1559 = vlaneseq
    %v1560 = vshrl.u32 %v1559, 7
    %v1561 = vsub.s32 0, %v1560
    %v1562 = vrot.slane %v1556, %v1561
    %v1580 = vunpack.c.l.b16 %v1539
    %v1581 = vunpack.c.l.b16 %v1540
    %v1582 = vunpack.c.l.b16 %v1541
    %v1583 = vunpack.c.l.b16 %v1542
    %v1584 = vunpack.c.l.b16 %v1543
    %v1585 = vunpack.c.l.b16 %v1544
    %v1586 = vunpack.c.l.b16 %v1545
    %v1587 = vunpack.c.l.b16 %v1546
    %v1588 = vunpack.c.l.b16 %v1547
    %v1589 = vunpack.c.l.b16 %v1548
    %v1590 = vunpack.c.l.b16 %v1549
    %v1591 = vunpack.c.l.b16 %v1550
    %v1592 = vunpack.c.l.b16 %v1551
    %v1593 = vunpack.c.l.b16 %v1552
    %v1594 = vunpack.c.l.b16 %v1553
    %v1595 = vunpack.c.l.b16 %v1554
    %v1596 = vpack.c.b16 %v1581, %v1580
    %v1597 = vpack.c.b16 %v1583, %v1582
    %v1598 = vpack.c.b16 %v1585, %v1584
    %v1599 = vpack.c.b16 %v1587, %v1586
    %v1600 = vpack.c.b16 %v1589, %v1588
    %v1601 = vpack.c.b16 %v1591, %v1590
    %v1602 = vpack.c.b16 %v1593, %v1592
    %v1603 = vpack.c.b16 %v1595, %v1594
    %1612 = vmatprep.subr.bf16.mxu0 0
    %1613 = vmatpush1.bf16.msra.mxu0 %v1596
    %1614 = vmatprep.subr.bf16.mxu0 0
    %1615 = vmatpush1.bf16.msra.mxu0 %v1597
    %1616 = vmatprep.subr.bf16.mxu0 0
    %1617 = vmatpush1.bf16.msra.mxu0 %v1598
    %1618 = vmatprep.subr.bf16.mxu0 0
    %1619 = vmatpush1.bf16.msra.mxu0 %v1599
    %1620 = vmatprep.subr.bf16.mxu0 0
    %1621 = vmatpush1.bf16.msra.mxu0 %v1600
    %1622 = vmatprep.subr.bf16.mxu0 0
    %1623 = vmatpush1.bf16.msra.mxu0 %v1601
    %1624 = vmatprep.subr.bf16.mxu0 0
    %1625 = vmatpush1.bf16.msra.mxu0 %v1602
    %1626 = vmatprep.subr.bf16.mxu0 0
    %1627 = vmatpush1.bf16.msra.mxu0 %v1603
    %1628 = vmatprep.subr.bf16.mxu0 0
    %1629 = vmatpush1.bf16.msra.mxu0 0
    %1630 = vmatprep.subr.bf16.mxu0 0
    %1631 = vmatpush1.bf16.msra.mxu0 0
    %1632 = vmatprep.subr.bf16.mxu0 0
    %1633 = vmatpush1.bf16.msra.mxu0 0
    %1634 = vmatprep.subr.bf16.mxu0 0
    %1635 = vmatpush1.bf16.msra.mxu0 0
    %1636 = vmatprep.subr.bf16.mxu0 0
    %1637 = vmatpush1.bf16.msra.mxu0 0
    %1638 = vmatprep.subr.bf16.mxu0 0
    %1639 = vmatpush1.bf16.msra.mxu0 0
    %1640 = vmatprep.subr.bf16.mxu0 0
    %1641 = vmatpush1.bf16.msra.mxu0 0
    %1642 = vmatprep.subr.bf16.mxu0 0
    %1643 = vmatpush1.bf16.msra.mxu0 0
    %1644 = vmatprep.mubr.bf16.mxu0 0
    %1645 = vmatmul.mubr.bf16.gmra.mrb[0].mxu0 %v1557
    %v1646 = vpop.f32.mrb[0].mxu0
    %v1647 = vadd.f32 %v1562, %v1646
    %v1648 = vpop.f32.mrb[0].mxu0
    %v1649 = vpop.f32.mrb[0].mxu0
    %v1650 = vpop.f32.mrb[0].mxu0
    %1651 = vdwg.mxu0
    %1652 = vst [vmem:[%s10] sm:$0xff] %v1166
    %1653 = vst [vmem:[%s10 + $0x8] sm:$0xff] %v1168
    %1654 = vst [vmem:[%s10 + $0x10] sm:$0xff] %v1647
    // Predicated region
    $region62: #{model_forward.1} parent=1 // pred_check
      _
    $region63: #{model_forward.1} parent=1 // pred_check_branch
      %1656 = sbr.rel (0) target = $region65
    $region64: #{model_forward.1} parent=1 // pred_region
      _
    $region65: #{model_forward.1} parent=1 // pred_fallthru
      _
    // Predicated region
    $region66: #{model_forward.1} parent=1 // pred_check
      _
    $region67: #{model_forward.1} parent=1 // pred_check_branch
      %1658 = sbr.rel (0) target = $region69
    $region68: #{model_forward.1} parent=1 // pred_region
      _
    $region69: #{model_forward.1} parent=1 // pred_fallthru
      _
    %1659 = vsyncpa [#allocation3], 1
    %1660 = vsyncpa [#allocation5], 1
    %1661 = vsyncpa [#allocation8], 1

</llo_original>
